<compile_context>
chip_gen: v7x
topology: tpu7x:2x2x1
jax: 0.10.0
libtpu: 0.0.40
codegen_flags: <defaults>
</compile_context>

<pallas_src>
import jax
import jax.numpy as jnp
from jax.experimental import pallas as pl
from jax.experimental.pallas import tpu as pltpu


def se_attention_kernel(x_ref, w1_ref, w2_ref, o_ref):
    # x_ref: (B, C, HW) f32 -- NCHW-native view, entire tensor resident in VMEM.
    x = x_ref[...]

    # Squeeze: global average pool over the spatial (lane) axis.
    pooled = jnp.mean(x, axis=-1)                                   # (B, C)

    # Excitation: Linear(C -> C/r) -> ReLU -> Linear(C/r -> C) -> Sigmoid,
    # batched over all B rows in two MXU matmuls.
    h = jnp.dot(pooled, w1_ref[...], preferred_element_type=jnp.float32)   # (B, CR)
    h = jnp.maximum(h, 0.0)
    s = jnp.dot(h, w2_ref[...], preferred_element_type=jnp.float32)        # (B, C)
    scale = jax.nn.sigmoid(s)                                              # (B, C)

    # Scale: broadcast the per-channel gate over all HW spatial positions.
    o_ref[...] = x * scale[:, :, None]


@jax.jit
def se_attention_forward(x_nchw, w1_t, w2_t):
    """x_nchw: (B, C, H, W).  w1_t: (C, C//r), w2_t: (C//r, C) -- torch weights
    pre-transposed to (in, out) so the kernel needs no in-kernel transpose."""
    b, c, h, w = x_nchw.shape
    hw = h * w
    # Contiguous reshape only -- no transpose, no extra HBM pass.
    x = x_nchw.reshape(b, c, hw)
    out = pl.pallas_call(
        se_attention_kernel,
        out_shape=jax.ShapeDtypeStruct((b, c, hw), x.dtype),
        # No grid: one invocation over the whole slab, everything in VMEM.
        in_specs=[
            pl.BlockSpec(memory_space=pltpu.MemorySpace.VMEM),
            pl.BlockSpec(memory_space=pltpu.MemorySpace.VMEM),
            pl.BlockSpec(memory_space=pltpu.MemorySpace.VMEM),
        ],
        out_specs=pl.BlockSpec(memory_space=pltpu.MemorySpace.VMEM),
    )(x, w1_t, w2_t)
    return out.reshape(b, c, h, w)


# ----------------------------- plain-JAX reference ---------------------------
def ref_forward(x, w1_t, w2_t):
    y = jnp.mean(x, axis=(2, 3))                  # AdaptiveAvgPool2d(1) -> (B, C)
    y = jnp.maximum(y @ w1_t, 0.0)                # Linear (no bias) + ReLU
    y = jax.nn.sigmoid(y @ w2_t)                  # Linear (no bias) + Sigmoid
    return x * y[:, :, None, None]


# ----------------------------------- main ------------------------------------
if __name__ == "__main__":
    B, C, RED, H, W = 2, 512, 16, 8, 8            # module defaults: channel=512, reduction=16
    CR = C // RED                                  # 32

    key = jax.random.PRNGKey(0)
    k1, k2, k3 = jax.random.split(key, 3)
    # torch nn.Linear stores weights as (out, in); pass them pre-transposed to
    # (in, out) layout for the kernel.
    w1 = 0.05 * jax.random.normal(k1, (C, CR), jnp.float32)   # Linear(C -> C/r).weight.T
    w2 = 0.05 * jax.random.normal(k2, (CR, C), jnp.float32)   # Linear(C/r -> C).weight.T
    x = jax.random.normal(k3, (B, C, H, W), jnp.float32)

    out = jax.block_until_ready(se_attention_forward(x, w1, w2))
    ref = ref_forward(x, w1, w2)
    err = float(jnp.max(jnp.abs(out - ref)))
    assert out.shape == (B, C, H, W), out.shape
    assert err < 1e-4, f"max abs err {err}"
    print("KERNEL_OK")
</pallas_src>

<mosaic_0001>
module attributes {stable_mosaic.version = 11 : i64} {
  func.func @se_attention_kernel(%arg0: memref<2x512x64xf32, #tpu.memory_space<vmem>>, %arg1: memref<512x32xf32, #tpu.memory_space<vmem>>, %arg2: memref<32x512xf32, #tpu.memory_space<vmem>>, %arg3: memref<2x512x64xf32, #tpu.memory_space<vmem>>) attributes {dimension_semantics = [], scalar_prefetch = 0 : i64, scratch_operands = 0 : i64, tpu.core_type = #tpu.core_type<tc>} {
    %c0 = arith.constant 0 : index
    %c0_0 = arith.constant 0 : index
    %c0_1 = arith.constant 0 : index
    %0 = vector.load %arg0[%c0, %c0_0, %c0_1] : memref<2x512x64xf32, #tpu.memory_space<vmem>>, vector<2x512x64xf32>
    %cst = arith.constant dense<0.000000e+00> : vector<2x512xf32>
    %1 = vector.multi_reduction <add>, %0, %cst [2] : vector<2x512x64xf32> to vector<2x512xf32>
    %cst_2 = arith.constant 6.400000e+01 : f32
    %2 = vector.broadcast %cst_2 : f32 to vector<2x512xf32>
    %3 = arith.divf %1, %2 : vector<2x512xf32>
    %c0_3 = arith.constant 0 : index
    %c0_4 = arith.constant 0 : index
    %4 = vector.load %arg1[%c0_3, %c0_4] : memref<512x32xf32, #tpu.memory_space<vmem>>, vector<512x32xf32>
    %cst_5 = arith.constant dense<0.000000e+00> : vector<2x32xf32>
    %5 = tpu.matmul %3, %4, %cst_5 {dimension_numbers = #tpu.dot_dimension_numbers<[1], [0], [0], [1], [0, 0, 1, 1], [], []>} : vector<2x512xf32>, vector<512x32xf32>, vector<2x32xf32> -> vector<2x32xf32>
    %cst_6 = arith.constant 0.000000e+00 : f32
    %6 = vector.broadcast %cst_6 : f32 to vector<2x32xf32>
    %7 = arith.maximumf %5, %6 : vector<2x32xf32>
    %c0_7 = arith.constant 0 : index
    %c0_8 = arith.constant 0 : index
    %8 = vector.load %arg2[%c0_7, %c0_8] : memref<32x512xf32, #tpu.memory_space<vmem>>, vector<32x512xf32>
    %cst_9 = arith.constant dense<0.000000e+00> : vector<2x512xf32>
    %9 = tpu.matmul %7, %8, %cst_9 {dimension_numbers = #tpu.dot_dimension_numbers<[1], [0], [0], [1], [0, 0, 1, 1], [], []>} : vector<2x32xf32>, vector<32x512xf32>, vector<2x512xf32> -> vector<2x512xf32>
    %10 = arith.negf %9 : vector<2x512xf32>
    %11 = math.exp %10 : vector<2x512xf32>
    %cst_10 = arith.constant 1.000000e+00 : f32
    %12 = vector.broadcast %cst_10 : f32 to vector<2x512xf32>
    %13 = arith.addf %12, %11 : vector<2x512xf32>
    %14 = arith.divf %12, %13 : vector<2x512xf32>
    %15 = vector.shape_cast %14 : vector<2x512xf32> to vector<2x512x1xf32>
    %16 = vector.broadcast %15 : vector<2x512x1xf32> to vector<2x512x64xf32>
    %17 = arith.mulf %0, %16 : vector<2x512x64xf32>
    %c0_11 = arith.constant 0 : index
    %c0_12 = arith.constant 0 : index
    %c0_13 = arith.constant 0 : index
    %18 = vector.load %arg3[%c0_11, %c0_12, %c0_13] : memref<2x512x64xf32, #tpu.memory_space<vmem>>, vector<2x512x64xf32>
    tpu.vector_store %arg3[%c0_11, %c0_12, %c0_13], %17 {strides = array<i32>} : memref<2x512x64xf32, #tpu.memory_space<vmem>>, vector<2x512x64xf32>,
    return
  }
}

</mosaic_0001>

<llo_original>
// kernel: se_attention_forward.1
$region0: #{se_attention_forward.1}
  #allocation0 [shape = 'u32[]', space=smem, size = 0x4, offset = 0x4, fixed_abs, tag = 'smem constant byte address 0x4 - core index']
  #allocation1 [shape = 'u32[144,128]{1,0:T(1,128)}', space=vmem, size = 0x12000, scoped, tag = 'internal scratch']
  %s0 = inlined_call_operand.vmem [shape: f32[2,512,64], index: 0, kind: input, shape index: {}]
  %s1 = inlined_call_operand.vmem [shape: f32[512,32], index: 1, kind: input, shape index: {}]
  %s2 = inlined_call_operand.vmem [shape: f32[32,512], index: 2, kind: input, shape index: {}]
  %s3 = inlined_call_operand.vmem [shape: f32[2,512,64], index: 3, kind: output, shape index: {}]
  %s4 = sld [smem:[#allocation0]]
  $region22: #{se_attention_forward.1} parent=0
    _
  %s6 = ssub.s32 1, %s4
  %s7 = scalar_select 0, %s6, %s4
  // Predicated region
  $region2: #{se_attention_forward.1} parent=0 // pred_check
    _
  $region3: #{se_attention_forward.1} parent=0 // pred_check_branch
    %9 = sbr.rel (0) target = $region5
  $region4: #{se_attention_forward.1} parent=0 // pred_region
    _
  $region5: #{se_attention_forward.1} parent=0 // pred_fallthru
    _
  // Predicated region
  $region6: #{se_attention_forward.1} parent=0 // pred_check
    _
  $region7: #{se_attention_forward.1} parent=0 // pred_check_branch
    %11 = sbr.rel (0) target = $region9
  $region8: #{se_attention_forward.1} parent=0 // pred_region
    _
  $region9: #{se_attention_forward.1} parent=0 // pred_fallthru
    _
  // Predicated region
  $region10: #{se_attention_forward.1} parent=0 // pred_check
    _
  $region11: #{se_attention_forward.1} parent=0 // pred_check_branch
    %13 = sbr.rel (0) target = $region13
  $region12: #{se_attention_forward.1} parent=0 // pred_region
    _
  $region13: #{se_attention_forward.1} parent=0 // pred_fallthru
    _
  %v14 = vld [vmem:[%s0] sm:$0xff]
  %v15 = vld [vmem:[%s0 + $0x8] sm:$0xff]
  %v16 = vld [vmem:[%s0 + $0x10] sm:$0xff]
  %v17 = vld [vmem:[%s0 + $0x18] sm:$0xff]
  %v18 = vld [vmem:[%s0 + $0x20] sm:$0xff]
  %v19 = vld [vmem:[%s0 + $0x28] sm:$0xff]
  %v20 = vld [vmem:[%s0 + $0x30] sm:$0xff]
  %v21 = vld [vmem:[%s0 + $0x38] sm:$0xff]
  %v22 = vld [vmem:[%s0 + $0x40] sm:$0xff]
  %v23 = vld [vmem:[%s0 + $0x48] sm:$0xff]
  %v24 = vld [vmem:[%s0 + $0x50] sm:$0xff]
  %v25 = vld [vmem:[%s0 + $0x58] sm:$0xff]
  %v26 = vld [vmem:[%s0 + $0x60] sm:$0xff]
  %v27 = vld [vmem:[%s0 + $0x68] sm:$0xff]
  %v28 = vld [vmem:[%s0 + $0x70] sm:$0xff]
  %v29 = vld [vmem:[%s0 + $0x78] sm:$0xff]
  %v30 = vld [vmem:[%s0 + $0x80] sm:$0xff]
  %v31 = vld [vmem:[%s0 + $0x88] sm:$0xff]
  %v32 = vld [vmem:[%s0 + $0x90] sm:$0xff]
  %v33 = vld [vmem:[%s0 + $0x98] sm:$0xff]
  %v34 = vld [vmem:[%s0 + $0xa0] sm:$0xff]
  %v35 = vld [vmem:[%s0 + $0xa8] sm:$0xff]
  %v36 = vld [vmem:[%s0 + $0xb0] sm:$0xff]
  %v37 = vld [vmem:[%s0 + $0xb8] sm:$0xff]
  %v38 = vld [vmem:[%s0 + $0xc0] sm:$0xff]
  %v39 = vld [vmem:[%s0 + $0xc8] sm:$0xff]
  %v40 = vld [vmem:[%s0 + $0xd0] sm:$0xff]
  %v41 = vld [vmem:[%s0 + $0xd8] sm:$0xff]
  %v42 = vld [vmem:[%s0 + $0xe0] sm:$0xff]
  %v43 = vld [vmem:[%s0 + $0xe8] sm:$0xff]
  %v44 = vld [vmem:[%s0 + $0xf0] sm:$0xff]
  %v45 = vld [vmem:[%s0 + $0xf8] sm:$0xff]
  %v46 = vld [vmem:[%s0 + $0x100] sm:$0xff]
  %v47 = vld [vmem:[%s0 + $0x108] sm:$0xff]
  %v48 = vld [vmem:[%s0 + $0x110] sm:$0xff]
  %v49 = vld [vmem:[%s0 + $0x118] sm:$0xff]
  %v50 = vld [vmem:[%s0 + $0x120] sm:$0xff]
  %v51 = vld [vmem:[%s0 + $0x128] sm:$0xff]
  %v52 = vld [vmem:[%s0 + $0x130] sm:$0xff]
  %v53 = vld [vmem:[%s0 + $0x138] sm:$0xff]
  %v54 = vld [vmem:[%s0 + $0x140] sm:$0xff]
  %v55 = vld [vmem:[%s0 + $0x148] sm:$0xff]
  %v56 = vld [vmem:[%s0 + $0x150] sm:$0xff]
  %v57 = vld [vmem:[%s0 + $0x158] sm:$0xff]
  %v58 = vld [vmem:[%s0 + $0x160] sm:$0xff]
  %v59 = vld [vmem:[%s0 + $0x168] sm:$0xff]
  %v60 = vld [vmem:[%s0 + $0x170] sm:$0xff]
  %v61 = vld [vmem:[%s0 + $0x178] sm:$0xff]
  %v62 = vld [vmem:[%s0 + $0x180] sm:$0xff]
  %v63 = vld [vmem:[%s0 + $0x188] sm:$0xff]
  %v64 = vld [vmem:[%s0 + $0x190] sm:$0xff]
  %v65 = vld [vmem:[%s0 + $0x198] sm:$0xff]
  %v66 = vld [vmem:[%s0 + $0x1a0] sm:$0xff]
  %v67 = vld [vmem:[%s0 + $0x1a8] sm:$0xff]
  %v68 = vld [vmem:[%s0 + $0x1b0] sm:$0xff]
  %v69 = vld [vmem:[%s0 + $0x1b8] sm:$0xff]
  %v70 = vld [vmem:[%s0 + $0x1c0] sm:$0xff]
  %v71 = vld [vmem:[%s0 + $0x1c8] sm:$0xff]
  %v72 = vld [vmem:[%s0 + $0x1d0] sm:$0xff]
  %v73 = vld [vmem:[%s0 + $0x1d8] sm:$0xff]
  %v74 = vld [vmem:[%s0 + $0x1e0] sm:$0xff]
  %v75 = vld [vmem:[%s0 + $0x1e8] sm:$0xff]
  %v76 = vld [vmem:[%s0 + $0x1f0] sm:$0xff]
  %v77 = vld [vmem:[%s0 + $0x1f8] sm:$0xff]
  %v78 = vld [vmem:[%s0 + $0x200] sm:$0xff]
  %v79 = vld [vmem:[%s0 + $0x208] sm:$0xff]
  %v80 = vld [vmem:[%s0 + $0x210] sm:$0xff]
  %v81 = vld [vmem:[%s0 + $0x218] sm:$0xff]
  %v82 = vld [vmem:[%s0 + $0x220] sm:$0xff]
  %v83 = vld [vmem:[%s0 + $0x228] sm:$0xff]
  %v84 = vld [vmem:[%s0 + $0x230] sm:$0xff]
  %v85 = vld [vmem:[%s0 + $0x238] sm:$0xff]
  %v86 = vld [vmem:[%s0 + $0x240] sm:$0xff]
  %v87 = vld [vmem:[%s0 + $0x248] sm:$0xff]
  %v88 = vld [vmem:[%s0 + $0x250] sm:$0xff]
  %v89 = vld [vmem:[%s0 + $0x258] sm:$0xff]
  %v90 = vld [vmem:[%s0 + $0x260] sm:$0xff]
  %v91 = vld [vmem:[%s0 + $0x268] sm:$0xff]
  %v92 = vld [vmem:[%s0 + $0x270] sm:$0xff]
  %v93 = vld [vmem:[%s0 + $0x278] sm:$0xff]
  %v94 = vld [vmem:[%s0 + $0x280] sm:$0xff]
  %v95 = vld [vmem:[%s0 + $0x288] sm:$0xff]
  %v96 = vld [vmem:[%s0 + $0x290] sm:$0xff]
  %v97 = vld [vmem:[%s0 + $0x298] sm:$0xff]
  %v98 = vld [vmem:[%s0 + $0x2a0] sm:$0xff]
  %v99 = vld [vmem:[%s0 + $0x2a8] sm:$0xff]
  %v100 = vld [vmem:[%s0 + $0x2b0] sm:$0xff]
  %v101 = vld [vmem:[%s0 + $0x2b8] sm:$0xff]
  %v102 = vld [vmem:[%s0 + $0x2c0] sm:$0xff]
  %v103 = vld [vmem:[%s0 + $0x2c8] sm:$0xff]
  %v104 = vld [vmem:[%s0 + $0x2d0] sm:$0xff]
  %v105 = vld [vmem:[%s0 + $0x2d8] sm:$0xff]
  %v106 = vld [vmem:[%s0 + $0x2e0] sm:$0xff]
  %v107 = vld [vmem:[%s0 + $0x2e8] sm:$0xff]
  %v108 = vld [vmem:[%s0 + $0x2f0] sm:$0xff]
  %v109 = vld [vmem:[%s0 + $0x2f8] sm:$0xff]
  %v110 = vld [vmem:[%s0 + $0x300] sm:$0xff]
  %v111 = vld [vmem:[%s0 + $0x308] sm:$0xff]
  %v112 = vld [vmem:[%s0 + $0x310] sm:$0xff]
  %v113 = vld [vmem:[%s0 + $0x318] sm:$0xff]
  %v114 = vld [vmem:[%s0 + $0x320] sm:$0xff]
  %v115 = vld [vmem:[%s0 + $0x328] sm:$0xff]
  %v116 = vld [vmem:[%s0 + $0x330] sm:$0xff]
  %v117 = vld [vmem:[%s0 + $0x338] sm:$0xff]
  %v118 = vld [vmem:[%s0 + $0x340] sm:$0xff]
  %v119 = vld [vmem:[%s0 + $0x348] sm:$0xff]
  %v120 = vld [vmem:[%s0 + $0x350] sm:$0xff]
  %v121 = vld [vmem:[%s0 + $0x358] sm:$0xff]
  %v122 = vld [vmem:[%s0 + $0x360] sm:$0xff]
  %v123 = vld [vmem:[%s0 + $0x368] sm:$0xff]
  %v124 = vld [vmem:[%s0 + $0x370] sm:$0xff]
  %v125 = vld [vmem:[%s0 + $0x378] sm:$0xff]
  %v126 = vld [vmem:[%s0 + $0x380] sm:$0xff]
  %v127 = vld [vmem:[%s0 + $0x388] sm:$0xff]
  %v128 = vld [vmem:[%s0 + $0x390] sm:$0xff]
  %v129 = vld [vmem:[%s0 + $0x398] sm:$0xff]
  %v130 = vld [vmem:[%s0 + $0x3a0] sm:$0xff]
  %v131 = vld [vmem:[%s0 + $0x3a8] sm:$0xff]
  %v132 = vld [vmem:[%s0 + $0x3b0] sm:$0xff]
  %v133 = vld [vmem:[%s0 + $0x3b8] sm:$0xff]
  %v134 = vld [vmem:[%s0 + $0x3c0] sm:$0xff]
  %v135 = vld [vmem:[%s0 + $0x3c8] sm:$0xff]
  %v136 = vld [vmem:[%s0 + $0x3d0] sm:$0xff]
  %v137 = vld [vmem:[%s0 + $0x3d8] sm:$0xff]
  %v138 = vld [vmem:[%s0 + $0x3e0] sm:$0xff]
  %v139 = vld [vmem:[%s0 + $0x3e8] sm:$0xff]
  %v140 = vld [vmem:[%s0 + $0x3f0] sm:$0xff]
  %v141 = vld [vmem:[%s0 + $0x3f8] sm:$0xff]
  %vm142 = vcmask 523264
  %v143 = vsel %vm142, %v14, 0.0
  %144 = vadd.xlane.f32.xlu0 %v143
  %v145 = vpop.xlane.xlu0 %144
  %v146 = vsel %vm142, %v15, 0.0
  %147 = vadd.xlane.f32.xlu0 %v146
  %v148 = vpop.xlane.xlu0 %147
  %v149 = vsel %vm142, %v16, 0.0
  %150 = vadd.xlane.f32.xlu0 %v149
  %v151 = vpop.xlane.xlu0 %150
  %v152 = vsel %vm142, %v17, 0.0
  %153 = vadd.xlane.f32.xlu0 %v152
  %v154 = vpop.xlane.xlu0 %153
  %v155 = vsel %vm142, %v18, 0.0
  %156 = vadd.xlane.f32.xlu0 %v155
  %v157 = vpop.xlane.xlu0 %156
  %v158 = vsel %vm142, %v19, 0.0
  %159 = vadd.xlane.f32.xlu0 %v158
  %v160 = vpop.xlane.xlu0 %159
  %v161 = vsel %vm142, %v20, 0.0
  %162 = vadd.xlane.f32.xlu0 %v161
  %v163 = vpop.xlane.xlu0 %162
  %v164 = vsel %vm142, %v21, 0.0
  %165 = vadd.xlane.f32.xlu0 %v164
  %v166 = vpop.xlane.xlu0 %165
  %v167 = vsel %vm142, %v22, 0.0
  %168 = vadd.xlane.f32.xlu0 %v167
  %v169 = vpop.xlane.xlu0 %168
  %v170 = vsel %vm142, %v23, 0.0
  %171 = vadd.xlane.f32.xlu0 %v170
  %v172 = vpop.xlane.xlu0 %171
  %v173 = vsel %vm142, %v24, 0.0
  %174 = vadd.xlane.f32.xlu0 %v173
  %v175 = vpop.xlane.xlu0 %174
  %v176 = vsel %vm142, %v25, 0.0
  %177 = vadd.xlane.f32.xlu0 %v176
  %v178 = vpop.xlane.xlu0 %177
  %v179 = vsel %vm142, %v26, 0.0
  %180 = vadd.xlane.f32.xlu0 %v179
  %v181 = vpop.xlane.xlu0 %180
  %v182 = vsel %vm142, %v27, 0.0
  %183 = vadd.xlane.f32.xlu0 %v182
  %v184 = vpop.xlane.xlu0 %183
  %v185 = vsel %vm142, %v28, 0.0
  %186 = vadd.xlane.f32.xlu0 %v185
  %v187 = vpop.xlane.xlu0 %186
  %v188 = vsel %vm142, %v29, 0.0
  %189 = vadd.xlane.f32.xlu0 %v188
  %v190 = vpop.xlane.xlu0 %189
  %v191 = vsel %vm142, %v30, 0.0
  %192 = vadd.xlane.f32.xlu0 %v191
  %v193 = vpop.xlane.xlu0 %192
  %v194 = vsel %vm142, %v31, 0.0
  %195 = vadd.xlane.f32.xlu0 %v194
  %v196 = vpop.xlane.xlu0 %195
  %v197 = vsel %vm142, %v32, 0.0
  %198 = vadd.xlane.f32.xlu0 %v197
  %v199 = vpop.xlane.xlu0 %198
  %v200 = vsel %vm142, %v33, 0.0
  %201 = vadd.xlane.f32.xlu0 %v200
  %v202 = vpop.xlane.xlu0 %201
  %v203 = vsel %vm142, %v34, 0.0
  %204 = vadd.xlane.f32.xlu0 %v203
  %v205 = vpop.xlane.xlu0 %204
  %v206 = vsel %vm142, %v35, 0.0
  %207 = vadd.xlane.f32.xlu0 %v206
  %v208 = vpop.xlane.xlu0 %207
  %v209 = vsel %vm142, %v36, 0.0
  %210 = vadd.xlane.f32.xlu0 %v209
  %v211 = vpop.xlane.xlu0 %210
  %v212 = vsel %vm142, %v37, 0.0
  %213 = vadd.xlane.f32.xlu0 %v212
  %v214 = vpop.xlane.xlu0 %213
  %v215 = vsel %vm142, %v38, 0.0
  %216 = vadd.xlane.f32.xlu0 %v215
  %v217 = vpop.xlane.xlu0 %216
  %v218 = vsel %vm142, %v39, 0.0
  %219 = vadd.xlane.f32.xlu0 %v218
  %v220 = vpop.xlane.xlu0 %219
  %v221 = vsel %vm142, %v40, 0.0
  %222 = vadd.xlane.f32.xlu0 %v221
  %v223 = vpop.xlane.xlu0 %222
  %v224 = vsel %vm142, %v41, 0.0
  %225 = vadd.xlane.f32.xlu0 %v224
  %v226 = vpop.xlane.xlu0 %225
  %v227 = vsel %vm142, %v42, 0.0
  %228 = vadd.xlane.f32.xlu0 %v227
  %v229 = vpop.xlane.xlu0 %228
  %v230 = vsel %vm142, %v43, 0.0
  %231 = vadd.xlane.f32.xlu0 %v230
  %v232 = vpop.xlane.xlu0 %231
  %v233 = vsel %vm142, %v44, 0.0
  %234 = vadd.xlane.f32.xlu0 %v233
  %v235 = vpop.xlane.xlu0 %234
  %v236 = vsel %vm142, %v45, 0.0
  %237 = vadd.xlane.f32.xlu0 %v236
  %v238 = vpop.xlane.xlu0 %237
  %v239 = vsel %vm142, %v46, 0.0
  %240 = vadd.xlane.f32.xlu0 %v239
  %v241 = vpop.xlane.xlu0 %240
  %v242 = vsel %vm142, %v47, 0.0
  %243 = vadd.xlane.f32.xlu0 %v242
  %v244 = vpop.xlane.xlu0 %243
  %v245 = vsel %vm142, %v48, 0.0
  %246 = vadd.xlane.f32.xlu0 %v245
  %v247 = vpop.xlane.xlu0 %246
  %v248 = vsel %vm142, %v49, 0.0
  %249 = vadd.xlane.f32.xlu0 %v248
  %v250 = vpop.xlane.xlu0 %249
  %v251 = vsel %vm142, %v50, 0.0
  %252 = vadd.xlane.f32.xlu0 %v251
  %v253 = vpop.xlane.xlu0 %252
  %v254 = vsel %vm142, %v51, 0.0
  %255 = vadd.xlane.f32.xlu0 %v254
  %v256 = vpop.xlane.xlu0 %255
  %v257 = vsel %vm142, %v52, 0.0
  %258 = vadd.xlane.f32.xlu0 %v257
  %v259 = vpop.xlane.xlu0 %258
  %v260 = vsel %vm142, %v53, 0.0
  %261 = vadd.xlane.f32.xlu0 %v260
  %v262 = vpop.xlane.xlu0 %261
  %v263 = vsel %vm142, %v54, 0.0
  %264 = vadd.xlane.f32.xlu0 %v263
  %v265 = vpop.xlane.xlu0 %264
  %v266 = vsel %vm142, %v55, 0.0
  %267 = vadd.xlane.f32.xlu0 %v266
  %v268 = vpop.xlane.xlu0 %267
  %v269 = vsel %vm142, %v56, 0.0
  %270 = vadd.xlane.f32.xlu0 %v269
  %v271 = vpop.xlane.xlu0 %270
  %v272 = vsel %vm142, %v57, 0.0
  %273 = vadd.xlane.f32.xlu0 %v272
  %v274 = vpop.xlane.xlu0 %273
  %v275 = vsel %vm142, %v58, 0.0
  %276 = vadd.xlane.f32.xlu0 %v275
  %v277 = vpop.xlane.xlu0 %276
  %v278 = vsel %vm142, %v59, 0.0
  %279 = vadd.xlane.f32.xlu0 %v278
  %v280 = vpop.xlane.xlu0 %279
  %v281 = vsel %vm142, %v60, 0.0
  %282 = vadd.xlane.f32.xlu0 %v281
  %v283 = vpop.xlane.xlu0 %282
  %v284 = vsel %vm142, %v61, 0.0
  %285 = vadd.xlane.f32.xlu0 %v284
  %v286 = vpop.xlane.xlu0 %285
  %v287 = vsel %vm142, %v62, 0.0
  %288 = vadd.xlane.f32.xlu0 %v287
  %v289 = vpop.xlane.xlu0 %288
  %v290 = vsel %vm142, %v63, 0.0
  %291 = vadd.xlane.f32.xlu0 %v290
  %v292 = vpop.xlane.xlu0 %291
  %v293 = vsel %vm142, %v64, 0.0
  %294 = vadd.xlane.f32.xlu0 %v293
  %v295 = vpop.xlane.xlu0 %294
  %v296 = vsel %vm142, %v65, 0.0
  %297 = vadd.xlane.f32.xlu0 %v296
  %v298 = vpop.xlane.xlu0 %297
  %v299 = vsel %vm142, %v66, 0.0
  %300 = vadd.xlane.f32.xlu0 %v299
  %v301 = vpop.xlane.xlu0 %300
  %v302 = vsel %vm142, %v67, 0.0
  %303 = vadd.xlane.f32.xlu0 %v302
  %v304 = vpop.xlane.xlu0 %303
  %v305 = vsel %vm142, %v68, 0.0
  %306 = vadd.xlane.f32.xlu0 %v305
  %v307 = vpop.xlane.xlu0 %306
  %v308 = vsel %vm142, %v69, 0.0
  %309 = vadd.xlane.f32.xlu0 %v308
  %v310 = vpop.xlane.xlu0 %309
  %v311 = vsel %vm142, %v70, 0.0
  %312 = vadd.xlane.f32.xlu0 %v311
  %v313 = vpop.xlane.xlu0 %312
  %v314 = vsel %vm142, %v71, 0.0
  %315 = vadd.xlane.f32.xlu0 %v314
  %v316 = vpop.xlane.xlu0 %315
  %v317 = vsel %vm142, %v72, 0.0
  %318 = vadd.xlane.f32.xlu0 %v317
  %v319 = vpop.xlane.xlu0 %318
  %v320 = vsel %vm142, %v73, 0.0
  %321 = vadd.xlane.f32.xlu0 %v320
  %v322 = vpop.xlane.xlu0 %321
  %v323 = vsel %vm142, %v74, 0.0
  %324 = vadd.xlane.f32.xlu0 %v323
  %v325 = vpop.xlane.xlu0 %324
  %v326 = vsel %vm142, %v75, 0.0
  %327 = vadd.xlane.f32.xlu0 %v326
  %v328 = vpop.xlane.xlu0 %327
  %v329 = vsel %vm142, %v76, 0.0
  %330 = vadd.xlane.f32.xlu0 %v329
  %v331 = vpop.xlane.xlu0 %330
  %v332 = vsel %vm142, %v77, 0.0
  %333 = vadd.xlane.f32.xlu0 %v332
  %v334 = vpop.xlane.xlu0 %333
  %v335 = vsel %vm142, %v78, 0.0
  %336 = vadd.xlane.f32.xlu0 %v335
  %v337 = vpop.xlane.xlu0 %336
  %v338 = vsel %vm142, %v79, 0.0
  %339 = vadd.xlane.f32.xlu0 %v338
  %v340 = vpop.xlane.xlu0 %339
  %v341 = vsel %vm142, %v80, 0.0
  %342 = vadd.xlane.f32.xlu0 %v341
  %v343 = vpop.xlane.xlu0 %342
  %v344 = vsel %vm142, %v81, 0.0
  %345 = vadd.xlane.f32.xlu0 %v344
  %v346 = vpop.xlane.xlu0 %345
  %v347 = vsel %vm142, %v82, 0.0
  %348 = vadd.xlane.f32.xlu0 %v347
  %v349 = vpop.xlane.xlu0 %348
  %v350 = vsel %vm142, %v83, 0.0
  %351 = vadd.xlane.f32.xlu0 %v350
  %v352 = vpop.xlane.xlu0 %351
  %v353 = vsel %vm142, %v84, 0.0
  %354 = vadd.xlane.f32.xlu0 %v353
  %v355 = vpop.xlane.xlu0 %354
  %v356 = vsel %vm142, %v85, 0.0
  %357 = vadd.xlane.f32.xlu0 %v356
  %v358 = vpop.xlane.xlu0 %357
  %v359 = vsel %vm142, %v86, 0.0
  %360 = vadd.xlane.f32.xlu0 %v359
  %v361 = vpop.xlane.xlu0 %360
  %v362 = vsel %vm142, %v87, 0.0
  %363 = vadd.xlane.f32.xlu0 %v362
  %v364 = vpop.xlane.xlu0 %363
  %v365 = vsel %vm142, %v88, 0.0
  %366 = vadd.xlane.f32.xlu0 %v365
  %v367 = vpop.xlane.xlu0 %366
  %v368 = vsel %vm142, %v89, 0.0
  %369 = vadd.xlane.f32.xlu0 %v368
  %v370 = vpop.xlane.xlu0 %369
  %v371 = vsel %vm142, %v90, 0.0
  %372 = vadd.xlane.f32.xlu0 %v371
  %v373 = vpop.xlane.xlu0 %372
  %v374 = vsel %vm142, %v91, 0.0
  %375 = vadd.xlane.f32.xlu0 %v374
  %v376 = vpop.xlane.xlu0 %375
  %v377 = vsel %vm142, %v92, 0.0
  %378 = vadd.xlane.f32.xlu0 %v377
  %v379 = vpop.xlane.xlu0 %378
  %v380 = vsel %vm142, %v93, 0.0
  %381 = vadd.xlane.f32.xlu0 %v380
  %v382 = vpop.xlane.xlu0 %381
  %v383 = vsel %vm142, %v94, 0.0
  %384 = vadd.xlane.f32.xlu0 %v383
  %v385 = vpop.xlane.xlu0 %384
  %v386 = vsel %vm142, %v95, 0.0
  %387 = vadd.xlane.f32.xlu0 %v386
  %v388 = vpop.xlane.xlu0 %387
  %v389 = vsel %vm142, %v96, 0.0
  %390 = vadd.xlane.f32.xlu0 %v389
  %v391 = vpop.xlane.xlu0 %390
  %v392 = vsel %vm142, %v97, 0.0
  %393 = vadd.xlane.f32.xlu0 %v392
  %v394 = vpop.xlane.xlu0 %393
  %v395 = vsel %vm142, %v98, 0.0
  %396 = vadd.xlane.f32.xlu0 %v395
  %v397 = vpop.xlane.xlu0 %396
  %v398 = vsel %vm142, %v99, 0.0
  %399 = vadd.xlane.f32.xlu0 %v398
  %v400 = vpop.xlane.xlu0 %399
  %v401 = vsel %vm142, %v100, 0.0
  %402 = vadd.xlane.f32.xlu0 %v401
  %v403 = vpop.xlane.xlu0 %402
  %v404 = vsel %vm142, %v101, 0.0
  %405 = vadd.xlane.f32.xlu0 %v404
  %v406 = vpop.xlane.xlu0 %405
  %v407 = vsel %vm142, %v102, 0.0
  %408 = vadd.xlane.f32.xlu0 %v407
  %v409 = vpop.xlane.xlu0 %408
  %v410 = vsel %vm142, %v103, 0.0
  %411 = vadd.xlane.f32.xlu0 %v410
  %v412 = vpop.xlane.xlu0 %411
  %v413 = vsel %vm142, %v104, 0.0
  %414 = vadd.xlane.f32.xlu0 %v413
  %v415 = vpop.xlane.xlu0 %414
  %v416 = vsel %vm142, %v105, 0.0
  %417 = vadd.xlane.f32.xlu0 %v416
  %v418 = vpop.xlane.xlu0 %417
  %v419 = vsel %vm142, %v106, 0.0
  %420 = vadd.xlane.f32.xlu0 %v419
  %v421 = vpop.xlane.xlu0 %420
  %v422 = vsel %vm142, %v107, 0.0
  %423 = vadd.xlane.f32.xlu0 %v422
  %v424 = vpop.xlane.xlu0 %423
  %v425 = vsel %vm142, %v108, 0.0
  %426 = vadd.xlane.f32.xlu0 %v425
  %v427 = vpop.xlane.xlu0 %426
  %v428 = vsel %vm142, %v109, 0.0
  %429 = vadd.xlane.f32.xlu0 %v428
  %v430 = vpop.xlane.xlu0 %429
  %v431 = vsel %vm142, %v110, 0.0
  %432 = vadd.xlane.f32.xlu0 %v431
  %v433 = vpop.xlane.xlu0 %432
  %v434 = vsel %vm142, %v111, 0.0
  %435 = vadd.xlane.f32.xlu0 %v434
  %v436 = vpop.xlane.xlu0 %435
  %v437 = vsel %vm142, %v112, 0.0
  %438 = vadd.xlane.f32.xlu0 %v437
  %v439 = vpop.xlane.xlu0 %438
  %v440 = vsel %vm142, %v113, 0.0
  %441 = vadd.xlane.f32.xlu0 %v440
  %v442 = vpop.xlane.xlu0 %441
  %v443 = vsel %vm142, %v114, 0.0
  %444 = vadd.xlane.f32.xlu0 %v443
  %v445 = vpop.xlane.xlu0 %444
  %v446 = vsel %vm142, %v115, 0.0
  %447 = vadd.xlane.f32.xlu0 %v446
  %v448 = vpop.xlane.xlu0 %447
  %v449 = vsel %vm142, %v116, 0.0
  %450 = vadd.xlane.f32.xlu0 %v449
  %v451 = vpop.xlane.xlu0 %450
  %v452 = vsel %vm142, %v117, 0.0
  %453 = vadd.xlane.f32.xlu0 %v452
  %v454 = vpop.xlane.xlu0 %453
  %v455 = vsel %vm142, %v118, 0.0
  %456 = vadd.xlane.f32.xlu0 %v455
  %v457 = vpop.xlane.xlu0 %456
  %v458 = vsel %vm142, %v119, 0.0
  %459 = vadd.xlane.f32.xlu0 %v458
  %v460 = vpop.xlane.xlu0 %459
  %v461 = vsel %vm142, %v120, 0.0
  %462 = vadd.xlane.f32.xlu0 %v461
  %v463 = vpop.xlane.xlu0 %462
  %v464 = vsel %vm142, %v121, 0.0
  %465 = vadd.xlane.f32.xlu0 %v464
  %v466 = vpop.xlane.xlu0 %465
  %v467 = vsel %vm142, %v122, 0.0
  %468 = vadd.xlane.f32.xlu0 %v467
  %v469 = vpop.xlane.xlu0 %468
  %v470 = vsel %vm142, %v123, 0.0
  %471 = vadd.xlane.f32.xlu0 %v470
  %v472 = vpop.xlane.xlu0 %471
  %v473 = vsel %vm142, %v124, 0.0
  %474 = vadd.xlane.f32.xlu0 %v473
  %v475 = vpop.xlane.xlu0 %474
  %v476 = vsel %vm142, %v125, 0.0
  %477 = vadd.xlane.f32.xlu0 %v476
  %v478 = vpop.xlane.xlu0 %477
  %v479 = vsel %vm142, %v126, 0.0
  %480 = vadd.xlane.f32.xlu0 %v479
  %v481 = vpop.xlane.xlu0 %480
  %v482 = vsel %vm142, %v127, 0.0
  %483 = vadd.xlane.f32.xlu0 %v482
  %v484 = vpop.xlane.xlu0 %483
  %v485 = vsel %vm142, %v128, 0.0
  %486 = vadd.xlane.f32.xlu0 %v485
  %v487 = vpop.xlane.xlu0 %486
  %v488 = vsel %vm142, %v129, 0.0
  %489 = vadd.xlane.f32.xlu0 %v488
  %v490 = vpop.xlane.xlu0 %489
  %v491 = vsel %vm142, %v130, 0.0
  %492 = vadd.xlane.f32.xlu0 %v491
  %v493 = vpop.xlane.xlu0 %492
  %v494 = vsel %vm142, %v131, 0.0
  %495 = vadd.xlane.f32.xlu0 %v494
  %v496 = vpop.xlane.xlu0 %495
  %v497 = vsel %vm142, %v132, 0.0
  %498 = vadd.xlane.f32.xlu0 %v497
  %v499 = vpop.xlane.xlu0 %498
  %v500 = vsel %vm142, %v133, 0.0
  %501 = vadd.xlane.f32.xlu0 %v500
  %v502 = vpop.xlane.xlu0 %501
  %v503 = vsel %vm142, %v134, 0.0
  %504 = vadd.xlane.f32.xlu0 %v503
  %v505 = vpop.xlane.xlu0 %504
  %v506 = vsel %vm142, %v135, 0.0
  %507 = vadd.xlane.f32.xlu0 %v506
  %v508 = vpop.xlane.xlu0 %507
  %v509 = vsel %vm142, %v136, 0.0
  %510 = vadd.xlane.f32.xlu0 %v509
  %v511 = vpop.xlane.xlu0 %510
  %v512 = vsel %vm142, %v137, 0.0
  %513 = vadd.xlane.f32.xlu0 %v512
  %v514 = vpop.xlane.xlu0 %513
  %v515 = vsel %vm142, %v138, 0.0
  %516 = vadd.xlane.f32.xlu0 %v515
  %v517 = vpop.xlane.xlu0 %516
  %v518 = vsel %vm142, %v139, 0.0
  %519 = vadd.xlane.f32.xlu0 %v518
  %v520 = vpop.xlane.xlu0 %519
  %v521 = vsel %vm142, %v140, 0.0
  %522 = vadd.xlane.f32.xlu0 %v521
  %v523 = vpop.xlane.xlu0 %522
  %v524 = vsel %vm142, %v141, 0.0
  %525 = vadd.xlane.f32.xlu0 %v524
  %v526 = vpop.xlane.xlu0 %525
  %v527 = vrcp.pop 64.0
  %v528 = vmul.f32 %v145, %v527
  %v529 = vmul.f32 %v148, %v527
  %v530 = vmul.f32 %v151, %v527
  %v531 = vmul.f32 %v154, %v527
  %v532 = vmul.f32 %v157, %v527
  %v533 = vmul.f32 %v160, %v527
  %v534 = vmul.f32 %v163, %v527
  %v535 = vmul.f32 %v166, %v527
  %v536 = vmul.f32 %v169, %v527
  %v537 = vmul.f32 %v172, %v527
  %v538 = vmul.f32 %v175, %v527
  %v539 = vmul.f32 %v178, %v527
  %v540 = vmul.f32 %v181, %v527
  %v541 = vmul.f32 %v184, %v527
  %v542 = vmul.f32 %v187, %v527
  %v543 = vmul.f32 %v190, %v527
  %v544 = vmul.f32 %v193, %v527
  %v545 = vmul.f32 %v196, %v527
  %v546 = vmul.f32 %v199, %v527
  %v547 = vmul.f32 %v202, %v527
  %v548 = vmul.f32 %v205, %v527
  %v549 = vmul.f32 %v208, %v527
  %v550 = vmul.f32 %v211, %v527
  %v551 = vmul.f32 %v214, %v527
  %v552 = vmul.f32 %v217, %v527
  %v553 = vmul.f32 %v220, %v527
  %v554 = vmul.f32 %v223, %v527
  %v555 = vmul.f32 %v226, %v527
  %v556 = vmul.f32 %v229, %v527
  %v557 = vmul.f32 %v232, %v527
  %v558 = vmul.f32 %v235, %v527
  %v559 = vmul.f32 %v238, %v527
  %v560 = vmul.f32 %v241, %v527
  %v561 = vmul.f32 %v244, %v527
  %v562 = vmul.f32 %v247, %v527
  %v563 = vmul.f32 %v250, %v527
  %v564 = vmul.f32 %v253, %v527
  %v565 = vmul.f32 %v256, %v527
  %v566 = vmul.f32 %v259, %v527
  %v567 = vmul.f32 %v262, %v527
  %v568 = vmul.f32 %v265, %v527
  %v569 = vmul.f32 %v268, %v527
  %v570 = vmul.f32 %v271, %v527
  %v571 = vmul.f32 %v274, %v527
  %v572 = vmul.f32 %v277, %v527
  %v573 = vmul.f32 %v280, %v527
  %v574 = vmul.f32 %v283, %v527
  %v575 = vmul.f32 %v286, %v527
  %v576 = vmul.f32 %v289, %v527
  %v577 = vmul.f32 %v292, %v527
  %v578 = vmul.f32 %v295, %v527
  %v579 = vmul.f32 %v298, %v527
  %v580 = vmul.f32 %v301, %v527
  %v581 = vmul.f32 %v304, %v527
  %v582 = vmul.f32 %v307, %v527
  %v583 = vmul.f32 %v310, %v527
  %v584 = vmul.f32 %v313, %v527
  %v585 = vmul.f32 %v316, %v527
  %v586 = vmul.f32 %v319, %v527
  %v587 = vmul.f32 %v322, %v527
  %v588 = vmul.f32 %v325, %v527
  %v589 = vmul.f32 %v328, %v527
  %v590 = vmul.f32 %v331, %v527
  %v591 = vmul.f32 %v334, %v527
  %v592 = vmul.f32 %v337, %v527
  %v593 = vmul.f32 %v340, %v527
  %v594 = vmul.f32 %v343, %v527
  %v595 = vmul.f32 %v346, %v527
  %v596 = vmul.f32 %v349, %v527
  %v597 = vmul.f32 %v352, %v527
  %v598 = vmul.f32 %v355, %v527
  %v599 = vmul.f32 %v358, %v527
  %v600 = vmul.f32 %v361, %v527
  %v601 = vmul.f32 %v364, %v527
  %v602 = vmul.f32 %v367, %v527
  %v603 = vmul.f32 %v370, %v527
  %v604 = vmul.f32 %v373, %v527
  %v605 = vmul.f32 %v376, %v527
  %v606 = vmul.f32 %v379, %v527
  %v607 = vmul.f32 %v382, %v527
  %v608 = vmul.f32 %v385, %v527
  %v609 = vmul.f32 %v388, %v527
  %v610 = vmul.f32 %v391, %v527
  %v611 = vmul.f32 %v394, %v527
  %v612 = vmul.f32 %v397, %v527
  %v613 = vmul.f32 %v400, %v527
  %v614 = vmul.f32 %v403, %v527
  %v615 = vmul.f32 %v406, %v527
  %v616 = vmul.f32 %v409, %v527
  %v617 = vmul.f32 %v412, %v527
  %v618 = vmul.f32 %v415, %v527
  %v619 = vmul.f32 %v418, %v527
  %v620 = vmul.f32 %v421, %v527
  %v621 = vmul.f32 %v424, %v527
  %v622 = vmul.f32 %v427, %v527
  %v623 = vmul.f32 %v430, %v527
  %v624 = vmul.f32 %v433, %v527
  %v625 = vmul.f32 %v436, %v527
  %v626 = vmul.f32 %v439, %v527
  %v627 = vmul.f32 %v442, %v527
  %v628 = vmul.f32 %v445, %v527
  %v629 = vmul.f32 %v448, %v527
  %v630 = vmul.f32 %v451, %v527
  %v631 = vmul.f32 %v454, %v527
  %v632 = vmul.f32 %v457, %v527
  %v633 = vmul.f32 %v460, %v527
  %v634 = vmul.f32 %v463, %v527
  %v635 = vmul.f32 %v466, %v527
  %v636 = vmul.f32 %v469, %v527
  %v637 = vmul.f32 %v472, %v527
  %v638 = vmul.f32 %v475, %v527
  %v639 = vmul.f32 %v478, %v527
  %v640 = vmul.f32 %v481, %v527
  %v641 = vmul.f32 %v484, %v527
  %v642 = vmul.f32 %v487, %v527
  %v643 = vmul.f32 %v490, %v527
  %v644 = vmul.f32 %v493, %v527
  %v645 = vmul.f32 %v496, %v527
  %v646 = vmul.f32 %v499, %v527
  %v647 = vmul.f32 %v502, %v527
  %v648 = vmul.f32 %v505, %v527
  %v649 = vmul.f32 %v508, %v527
  %v650 = vmul.f32 %v511, %v527
  %v651 = vmul.f32 %v514, %v527
  %v652 = vmul.f32 %v517, %v527
  %v653 = vmul.f32 %v520, %v527
  %v654 = vmul.f32 %v523, %v527
  %v655 = vmul.f32 %v526, %v527
  %v656 = vld [vmem:[%s1] sm:$0xff]
  %v657 = vld [vmem:[%s1 + $0x8] sm:$0xff]
  %v658 = vld [vmem:[%s1 + $0x10] sm:$0xff]
  %v659 = vld [vmem:[%s1 + $0x18] sm:$0xff]
  %v660 = vld [vmem:[%s1 + $0x20] sm:$0xff]
  %v661 = vld [vmem:[%s1 + $0x28] sm:$0xff]
  %v662 = vld [vmem:[%s1 + $0x30] sm:$0xff]
  %v663 = vld [vmem:[%s1 + $0x38] sm:$0xff]
  %v664 = vld [vmem:[%s1 + $0x40] sm:$0xff]
  %v665 = vld [vmem:[%s1 + $0x48] sm:$0xff]
  %v666 = vld [vmem:[%s1 + $0x50] sm:$0xff]
  %v667 = vld [vmem:[%s1 + $0x58] sm:$0xff]
  %v668 = vld [vmem:[%s1 + $0x60] sm:$0xff]
  %v669 = vld [vmem:[%s1 + $0x68] sm:$0xff]
  %v670 = vld [vmem:[%s1 + $0x70] sm:$0xff]
  %v671 = vld [vmem:[%s1 + $0x78] sm:$0xff]
  %v672 = vld [vmem:[%s1 + $0x80] sm:$0xff]
  %v673 = vld [vmem:[%s1 + $0x88] sm:$0xff]
  %v674 = vld [vmem:[%s1 + $0x90] sm:$0xff]
  %v675 = vld [vmem:[%s1 + $0x98] sm:$0xff]
  %v676 = vld [vmem:[%s1 + $0xa0] sm:$0xff]
  %v677 = vld [vmem:[%s1 + $0xa8] sm:$0xff]
  %v678 = vld [vmem:[%s1 + $0xb0] sm:$0xff]
  %v679 = vld [vmem:[%s1 + $0xb8] sm:$0xff]
  %v680 = vld [vmem:[%s1 + $0xc0] sm:$0xff]
  %v681 = vld [vmem:[%s1 + $0xc8] sm:$0xff]
  %v682 = vld [vmem:[%s1 + $0xd0] sm:$0xff]
  %v683 = vld [vmem:[%s1 + $0xd8] sm:$0xff]
  %v684 = vld [vmem:[%s1 + $0xe0] sm:$0xff]
  %v685 = vld [vmem:[%s1 + $0xe8] sm:$0xff]
  %v686 = vld [vmem:[%s1 + $0xf0] sm:$0xff]
  %v687 = vld [vmem:[%s1 + $0xf8] sm:$0xff]
  %v688 = vld [vmem:[%s1 + $0x100] sm:$0xff]
  %v689 = vld [vmem:[%s1 + $0x108] sm:$0xff]
  %v690 = vld [vmem:[%s1 + $0x110] sm:$0xff]
  %v691 = vld [vmem:[%s1 + $0x118] sm:$0xff]
  %v692 = vld [vmem:[%s1 + $0x120] sm:$0xff]
  %v693 = vld [vmem:[%s1 + $0x128] sm:$0xff]
  %v694 = vld [vmem:[%s1 + $0x130] sm:$0xff]
  %v695 = vld [vmem:[%s1 + $0x138] sm:$0xff]
  %v696 = vld [vmem:[%s1 + $0x140] sm:$0xff]
  %v697 = vld [vmem:[%s1 + $0x148] sm:$0xff]
  %v698 = vld [vmem:[%s1 + $0x150] sm:$0xff]
  %v699 = vld [vmem:[%s1 + $0x158] sm:$0xff]
  %v700 = vld [vmem:[%s1 + $0x160] sm:$0xff]
  %v701 = vld [vmem:[%s1 + $0x168] sm:$0xff]
  %v702 = vld [vmem:[%s1 + $0x170] sm:$0xff]
  %v703 = vld [vmem:[%s1 + $0x178] sm:$0xff]
  %v704 = vld [vmem:[%s1 + $0x180] sm:$0xff]
  %v705 = vld [vmem:[%s1 + $0x188] sm:$0xff]
  %v706 = vld [vmem:[%s1 + $0x190] sm:$0xff]
  %v707 = vld [vmem:[%s1 + $0x198] sm:$0xff]
  %v708 = vld [vmem:[%s1 + $0x1a0] sm:$0xff]
  %v709 = vld [vmem:[%s1 + $0x1a8] sm:$0xff]
  %v710 = vld [vmem:[%s1 + $0x1b0] sm:$0xff]
  %v711 = vld [vmem:[%s1 + $0x1b8] sm:$0xff]
  %v712 = vld [vmem:[%s1 + $0x1c0] sm:$0xff]
  %v713 = vld [vmem:[%s1 + $0x1c8] sm:$0xff]
  %v714 = vld [vmem:[%s1 + $0x1d0] sm:$0xff]
  %v715 = vld [vmem:[%s1 + $0x1d8] sm:$0xff]
  %v716 = vld [vmem:[%s1 + $0x1e0] sm:$0xff]
  %v717 = vld [vmem:[%s1 + $0x1e8] sm:$0xff]
  %v718 = vld [vmem:[%s1 + $0x1f0] sm:$0xff]
  %v719 = vld [vmem:[%s1 + $0x1f8] sm:$0xff]
  %v848 = vlaneseq
  %v849 = vand.u32 %v848, 127
  %v850 = vlaneseq
  %v851 = vshrl.u32 %v850, 7
  %v852 = vsub.s32 %v849, %v851
  %v853 = vrot.slane %v528, %v852
  %v854 = vadd.s32 %v849, 4294967288
  %v855 = vlaneseq
  %v856 = vshrl.u32 %v855, 7
  %v857 = vsub.s32 %v854, %v856
  %v858 = vrot.slane %v529, %v857
  %vm859 = vcmask 130112
  %v860 = vsel %vm859, %v858, %v853
  %v861 = vadd.s32 %v849, 4294967280
  %v862 = vlaneseq
  %v863 = vshrl.u32 %v862, 7
  %v864 = vsub.s32 %v861, %v863
  %v865 = vrot.slane %v530, %v864
  %vm866 = vcmask 195712
  %v867 = vsel %vm866, %v865, %v860
  %v868 = vadd.s32 %v849, 4294967272
  %v869 = vlaneseq
  %v870 = vshrl.u32 %v869, 7
  %v871 = vsub.s32 %v868, %v870
  %v872 = vrot.slane %v531, %v871
  %vm873 = vcmask 261312
  %v874 = vsel %vm873, %v872, %v867
  %v875 = vadd.s32 %v849, 4294967264
  %v876 = vlaneseq
  %v877 = vshrl.u32 %v876, 7
  %v878 = vsub.s32 %v875, %v877
  %v879 = vrot.slane %v532, %v878
  %vm880 = vcmask 326912
  %v881 = vsel %vm880, %v879, %v874
  %v882 = vadd.s32 %v849, 4294967256
  %v883 = vlaneseq
  %v884 = vshrl.u32 %v883, 7
  %v885 = vsub.s32 %v882, %v884
  %v886 = vrot.slane %v533, %v885
  %vm887 = vcmask 392512
  %v888 = vsel %vm887, %v886, %v881
  %v889 = vadd.s32 %v849, 4294967248
  %v890 = vlaneseq
  %v891 = vshrl.u32 %v890, 7
  %v892 = vsub.s32 %v889, %v891
  %v893 = vrot.slane %v534, %v892
  %vm894 = vcmask 458112
  %v895 = vsel %vm894, %v893, %v888
  %v896 = vadd.s32 %v849, 4294967240
  %v897 = vlaneseq
  %v898 = vshrl.u32 %v897, 7
  %v899 = vsub.s32 %v896, %v898
  %v900 = vrot.slane %v535, %v899
  %vm901 = vcmask 523712
  %v902 = vsel %vm901, %v900, %v895
  %v903 = vadd.s32 %v849, 4294967232
  %v904 = vlaneseq
  %v905 = vshrl.u32 %v904, 7
  %v906 = vsub.s32 %v903, %v905
  %v907 = vrot.slane %v536, %v906
  %vm908 = vcmask 589312
  %v909 = vsel %vm908, %v907, %v902
  %v910 = vadd.s32 %v849, 4294967224
  %v911 = vlaneseq
  %v912 = vshrl.u32 %v911, 7
  %v913 = vsub.s32 %v910, %v912
  %v914 = vrot.slane %v537, %v913
  %vm915 = vcmask 654912
  %v916 = vsel %vm915, %v914, %v909
  %v917 = vadd.s32 %v849, 4294967216
  %v918 = vlaneseq
  %v919 = vshrl.u32 %v918, 7
  %v920 = vsub.s32 %v917, %v919
  %v921 = vrot.slane %v538, %v920
  %vm922 = vcmask 720512
  %v923 = vsel %vm922, %v921, %v916
  %v924 = vadd.s32 %v849, 4294967208
  %v925 = vlaneseq
  %v926 = vshrl.u32 %v925, 7
  %v927 = vsub.s32 %v924, %v926
  %v928 = vrot.slane %v539, %v927
  %vm929 = vcmask 786112
  %v930 = vsel %vm929, %v928, %v923
  %v931 = vadd.s32 %v849, 4294967200
  %v932 = vlaneseq
  %v933 = vshrl.u32 %v932, 7
  %v934 = vsub.s32 %v931, %v933
  %v935 = vrot.slane %v540, %v934
  %vm936 = vcmask 851712
  %v937 = vsel %vm936, %v935, %v930
  %v938 = vadd.s32 %v849, 4294967192
  %v939 = vlaneseq
  %v940 = vshrl.u32 %v939, 7
  %v941 = vsub.s32 %v938, %v940
  %v942 = vrot.slane %v541, %v941
  %vm943 = vcmask 917312
  %v944 = vsel %vm943, %v942, %v937
  %v945 = vadd.s32 %v849, 4294967184
  %v946 = vlaneseq
  %v947 = vshrl.u32 %v946, 7
  %v948 = vsub.s32 %v945, %v947
  %v949 = vrot.slane %v542, %v948
  %vm950 = vcmask 982912
  %v951 = vsel %vm950, %v949, %v944
  %v952 = vadd.s32 %v849, 4294967176
  %v953 = vlaneseq
  %v954 = vshrl.u32 %v953, 7
  %v955 = vsub.s32 %v952, %v954
  %v956 = vrot.slane %v543, %v955
  %vm957 = vcmask 1048512
  %v958 = vsel %vm957, %v956, %v951
  %v959 = vlaneseq
  %v960 = vshrl.u32 %v959, 7
  %v961 = vsub.s32 %v849, %v960
  %v962 = vrot.slane %v544, %v961
  %v963 = vlaneseq
  %v964 = vshrl.u32 %v963, 7
  %v965 = vsub.s32 %v854, %v964
  %v966 = vrot.slane %v545, %v965
  %v967 = vsel %vm859, %v966, %v962
  %v968 = vlaneseq
  %v969 = vshrl.u32 %v968, 7
  %v970 = vsub.s32 %v861, %v969
  %v971 = vrot.slane %v546, %v970
  %v972 = vsel %vm866, %v971, %v967
  %v973 = vlaneseq
  %v974 = vshrl.u32 %v973, 7
  %v975 = vsub.s32 %v868, %v974
  %v976 = vrot.slane %v547, %v975
  %v977 = vsel %vm873, %v976, %v972
  %v978 = vlaneseq
  %v979 = vshrl.u32 %v978, 7
  %v980 = vsub.s32 %v875, %v979
  %v981 = vrot.slane %v548, %v980
  %v982 = vsel %vm880, %v981, %v977
  %v983 = vlaneseq
  %v984 = vshrl.u32 %v983, 7
  %v985 = vsub.s32 %v882, %v984
  %v986 = vrot.slane %v549, %v985
  %v987 = vsel %vm887, %v986, %v982
  %v988 = vlaneseq
  %v989 = vshrl.u32 %v988, 7
  %v990 = vsub.s32 %v889, %v989
  %v991 = vrot.slane %v550, %v990
  %v992 = vsel %vm894, %v991, %v987
  %v993 = vlaneseq
  %v994 = vshrl.u32 %v993, 7
  %v995 = vsub.s32 %v896, %v994
  %v996 = vrot.slane %v551, %v995
  %v997 = vsel %vm901, %v996, %v992
  %v998 = vlaneseq
  %v999 = vshrl.u32 %v998, 7
  %v1000 = vsub.s32 %v903, %v999
  %v1001 = vrot.slane %v552, %v1000
  %v1002 = vsel %vm908, %v1001, %v997
  %v1003 = vlaneseq
  %v1004 = vshrl.u32 %v1003, 7
  %v1005 = vsub.s32 %v910, %v1004
  %v1006 = vrot.slane %v553, %v1005
  %v1007 = vsel %vm915, %v1006, %v1002
  %v1008 = vlaneseq
  %v1009 = vshrl.u32 %v1008, 7
  %v1010 = vsub.s32 %v917, %v1009
  %v1011 = vrot.slane %v554, %v1010
  %v1012 = vsel %vm922, %v1011, %v1007
  %v1013 = vlaneseq
  %v1014 = vshrl.u32 %v1013, 7
  %v1015 = vsub.s32 %v924, %v1014
  %v1016 = vrot.slane %v555, %v1015
  %v1017 = vsel %vm929, %v1016, %v1012
  %v1018 = vlaneseq
  %v1019 = vshrl.u32 %v1018, 7
  %v1020 = vsub.s32 %v931, %v1019
  %v1021 = vrot.slane %v556, %v1020
  %v1022 = vsel %vm936, %v1021, %v1017
  %v1023 = vlaneseq
  %v1024 = vshrl.u32 %v1023, 7
  %v1025 = vsub.s32 %v938, %v1024
  %v1026 = vrot.slane %v557, %v1025
  %v1027 = vsel %vm943, %v1026, %v1022
  %v1028 = vlaneseq
  %v1029 = vshrl.u32 %v1028, 7
  %v1030 = vsub.s32 %v945, %v1029
  %v1031 = vrot.slane %v558, %v1030
  %v1032 = vsel %vm950, %v1031, %v1027
  %v1033 = vlaneseq
  %v1034 = vshrl.u32 %v1033, 7
  %v1035 = vsub.s32 %v952, %v1034
  %v1036 = vrot.slane %v559, %v1035
  %v1037 = vsel %vm957, %v1036, %v1032
  %v1038 = vlaneseq
  %v1039 = vshrl.u32 %v1038, 7
  %v1040 = vsub.s32 %v849, %v1039
  %v1041 = vrot.slane %v560, %v1040
  %v1042 = vlaneseq
  %v1043 = vshrl.u32 %v1042, 7
  %v1044 = vsub.s32 %v854, %v1043
  %v1045 = vrot.slane %v561, %v1044
  %v1046 = vsel %vm859, %v1045, %v1041
  %v1047 = vlaneseq
  %v1048 = vshrl.u32 %v1047, 7
  %v1049 = vsub.s32 %v861, %v1048
  %v1050 = vrot.slane %v562, %v1049
  %v1051 = vsel %vm866, %v1050, %v1046
  %v1052 = vlaneseq
  %v1053 = vshrl.u32 %v1052, 7
  %v1054 = vsub.s32 %v868, %v1053
  %v1055 = vrot.slane %v563, %v1054
  %v1056 = vsel %vm873, %v1055, %v1051
  %v1057 = vlaneseq
  %v1058 = vshrl.u32 %v1057, 7
  %v1059 = vsub.s32 %v875, %v1058
  %v1060 = vrot.slane %v564, %v1059
  %v1061 = vsel %vm880, %v1060, %v1056
  %v1062 = vlaneseq
  %v1063 = vshrl.u32 %v1062, 7
  %v1064 = vsub.s32 %v882, %v1063
  %v1065 = vrot.slane %v565, %v1064
  %v1066 = vsel %vm887, %v1065, %v1061
  %v1067 = vlaneseq
  %v1068 = vshrl.u32 %v1067, 7
  %v1069 = vsub.s32 %v889, %v1068
  %v1070 = vrot.slane %v566, %v1069
  %v1071 = vsel %vm894, %v1070, %v1066
  %v1072 = vlaneseq
  %v1073 = vshrl.u32 %v1072, 7
  %v1074 = vsub.s32 %v896, %v1073
  %v1075 = vrot.slane %v567, %v1074
  %v1076 = vsel %vm901, %v1075, %v1071
  %v1077 = vlaneseq
  %v1078 = vshrl.u32 %v1077, 7
  %v1079 = vsub.s32 %v903, %v1078
  %v1080 = vrot.slane %v568, %v1079
  %v1081 = vsel %vm908, %v1080, %v1076
  %v1082 = vlaneseq
  %v1083 = vshrl.u32 %v1082, 7
  %v1084 = vsub.s32 %v910, %v1083
  %v1085 = vrot.slane %v569, %v1084
  %v1086 = vsel %vm915, %v1085, %v1081
  %v1087 = vlaneseq
  %v1088 = vshrl.u32 %v1087, 7
  %v1089 = vsub.s32 %v917, %v1088
  %v1090 = vrot.slane %v570, %v1089
  %v1091 = vsel %vm922, %v1090, %v1086
  %v1092 = vlaneseq
  %v1093 = vshrl.u32 %v1092, 7
  %v1094 = vsub.s32 %v924, %v1093
  %v1095 = vrot.slane %v571, %v1094
  %v1096 = vsel %vm929, %v1095, %v1091
  %v1097 = vlaneseq
  %v1098 = vshrl.u32 %v1097, 7
  %v1099 = vsub.s32 %v931, %v1098
  %v1100 = vrot.slane %v572, %v1099
  %v1101 = vsel %vm936, %v1100, %v1096
  %v1102 = vlaneseq
  %v1103 = vshrl.u32 %v1102, 7
  %v1104 = vsub.s32 %v938, %v1103
  %v1105 = vrot.slane %v573, %v1104
  %v1106 = vsel %vm943, %v1105, %v1101
  %v1107 = vlaneseq
  %v1108 = vshrl.u32 %v1107, 7
  %v1109 = vsub.s32 %v945, %v1108
  %v1110 = vrot.slane %v574, %v1109
  %v1111 = vsel %vm950, %v1110, %v1106
  %v1112 = vlaneseq
  %v1113 = vshrl.u32 %v1112, 7
  %v1114 = vsub.s32 %v952, %v1113
  %v1115 = vrot.slane %v575, %v1114
  %v1116 = vsel %vm957, %v1115, %v1111
  %v1117 = vlaneseq
  %v1118 = vshrl.u32 %v1117, 7
  %v1119 = vsub.s32 %v849, %v1118
  %v1120 = vrot.slane %v576, %v1119
  %v1121 = vlaneseq
  %v1122 = vshrl.u32 %v1121, 7
  %v1123 = vsub.s32 %v854, %v1122
  %v1124 = vrot.slane %v577, %v1123
  %v1125 = vsel %vm859, %v1124, %v1120
  %v1126 = vlaneseq
  %v1127 = vshrl.u32 %v1126, 7
  %v1128 = vsub.s32 %v861, %v1127
  %v1129 = vrot.slane %v578, %v1128
  %v1130 = vsel %vm866, %v1129, %v1125
  %v1131 = vlaneseq
  %v1132 = vshrl.u32 %v1131, 7
  %v1133 = vsub.s32 %v868, %v1132
  %v1134 = vrot.slane %v579, %v1133
  %v1135 = vsel %vm873, %v1134, %v1130
  %v1136 = vlaneseq
  %v1137 = vshrl.u32 %v1136, 7
  %v1138 = vsub.s32 %v875, %v1137
  %v1139 = vrot.slane %v580, %v1138
  %v1140 = vsel %vm880, %v1139, %v1135
  %v1141 = vlaneseq
  %v1142 = vshrl.u32 %v1141, 7
  %v1143 = vsub.s32 %v882, %v1142
  %v1144 = vrot.slane %v581, %v1143
  %v1145 = vsel %vm887, %v1144, %v1140
  %v1146 = vlaneseq
  %v1147 = vshrl.u32 %v1146, 7
  %v1148 = vsub.s32 %v889, %v1147
  %v1149 = vrot.slane %v582, %v1148
  %v1150 = vsel %vm894, %v1149, %v1145
  %v1151 = vlaneseq
  %v1152 = vshrl.u32 %v1151, 7
  %v1153 = vsub.s32 %v896, %v1152
  %v1154 = vrot.slane %v583, %v1153
  %v1155 = vsel %vm901, %v1154, %v1150
  %v1156 = vlaneseq
  %v1157 = vshrl.u32 %v1156, 7
  %v1158 = vsub.s32 %v903, %v1157
  %v1159 = vrot.slane %v584, %v1158
  %v1160 = vsel %vm908, %v1159, %v1155
  %v1161 = vlaneseq
  %v1162 = vshrl.u32 %v1161, 7
  %v1163 = vsub.s32 %v910, %v1162
  %v1164 = vrot.slane %v585, %v1163
  %v1165 = vsel %vm915, %v1164, %v1160
  %v1166 = vlaneseq
  %v1167 = vshrl.u32 %v1166, 7
  %v1168 = vsub.s32 %v917, %v1167
  %v1169 = vrot.slane %v586, %v1168
  %v1170 = vsel %vm922, %v1169, %v1165
  %v1171 = vlaneseq
  %v1172 = vshrl.u32 %v1171, 7
  %v1173 = vsub.s32 %v924, %v1172
  %v1174 = vrot.slane %v587, %v1173
  %v1175 = vsel %vm929, %v1174, %v1170
  %v1176 = vlaneseq
  %v1177 = vshrl.u32 %v1176, 7
  %v1178 = vsub.s32 %v931, %v1177
  %v1179 = vrot.slane %v588, %v1178
  %v1180 = vsel %vm936, %v1179, %v1175
  %v1181 = vlaneseq
  %v1182 = vshrl.u32 %v1181, 7
  %v1183 = vsub.s32 %v938, %v1182
  %v1184 = vrot.slane %v589, %v1183
  %v1185 = vsel %vm943, %v1184, %v1180
  %v1186 = vlaneseq
  %v1187 = vshrl.u32 %v1186, 7
  %v1188 = vsub.s32 %v945, %v1187
  %v1189 = vrot.slane %v590, %v1188
  %v1190 = vsel %vm950, %v1189, %v1185
  %v1191 = vlaneseq
  %v1192 = vshrl.u32 %v1191, 7
  %v1193 = vsub.s32 %v952, %v1192
  %v1194 = vrot.slane %v591, %v1193
  %v1195 = vsel %vm957, %v1194, %v1190
  %v1196 = vlaneseq
  %v1197 = vshrl.u32 %v1196, 7
  %v1198 = vsub.s32 %v849, %v1197
  %v1199 = vrot.slane %v592, %v1198
  %v1200 = vlaneseq
  %v1201 = vshrl.u32 %v1200, 7
  %v1202 = vsub.s32 %v854, %v1201
  %v1203 = vrot.slane %v593, %v1202
  %v1204 = vsel %vm859, %v1203, %v1199
  %v1205 = vlaneseq
  %v1206 = vshrl.u32 %v1205, 7
  %v1207 = vsub.s32 %v861, %v1206
  %v1208 = vrot.slane %v594, %v1207
  %v1209 = vsel %vm866, %v1208, %v1204
  %v1210 = vlaneseq
  %v1211 = vshrl.u32 %v1210, 7
  %v1212 = vsub.s32 %v868, %v1211
  %v1213 = vrot.slane %v595, %v1212
  %v1214 = vsel %vm873, %v1213, %v1209
  %v1215 = vlaneseq
  %v1216 = vshrl.u32 %v1215, 7
  %v1217 = vsub.s32 %v875, %v1216
  %v1218 = vrot.slane %v596, %v1217
  %v1219 = vsel %vm880, %v1218, %v1214
  %v1220 = vlaneseq
  %v1221 = vshrl.u32 %v1220, 7
  %v1222 = vsub.s32 %v882, %v1221
  %v1223 = vrot.slane %v597, %v1222
  %v1224 = vsel %vm887, %v1223, %v1219
  %v1225 = vlaneseq
  %v1226 = vshrl.u32 %v1225, 7
  %v1227 = vsub.s32 %v889, %v1226
  %v1228 = vrot.slane %v598, %v1227
  %v1229 = vsel %vm894, %v1228, %v1224
  %v1230 = vlaneseq
  %v1231 = vshrl.u32 %v1230, 7
  %v1232 = vsub.s32 %v896, %v1231
  %v1233 = vrot.slane %v599, %v1232
  %v1234 = vsel %vm901, %v1233, %v1229
  %v1235 = vlaneseq
  %v1236 = vshrl.u32 %v1235, 7
  %v1237 = vsub.s32 %v903, %v1236
  %v1238 = vrot.slane %v600, %v1237
  %v1239 = vsel %vm908, %v1238, %v1234
  %v1240 = vlaneseq
  %v1241 = vshrl.u32 %v1240, 7
  %v1242 = vsub.s32 %v910, %v1241
  %v1243 = vrot.slane %v601, %v1242
  %v1244 = vsel %vm915, %v1243, %v1239
  %v1245 = vlaneseq
  %v1246 = vshrl.u32 %v1245, 7
  %v1247 = vsub.s32 %v917, %v1246
  %v1248 = vrot.slane %v602, %v1247
  %v1249 = vsel %vm922, %v1248, %v1244
  %v1250 = vlaneseq
  %v1251 = vshrl.u32 %v1250, 7
  %v1252 = vsub.s32 %v924, %v1251
  %v1253 = vrot.slane %v603, %v1252
  %v1254 = vsel %vm929, %v1253, %v1249
  %v1255 = vlaneseq
  %v1256 = vshrl.u32 %v1255, 7
  %v1257 = vsub.s32 %v931, %v1256
  %v1258 = vrot.slane %v604, %v1257
  %v1259 = vsel %vm936, %v1258, %v1254
  %v1260 = vlaneseq
  %v1261 = vshrl.u32 %v1260, 7
  %v1262 = vsub.s32 %v938, %v1261
  %v1263 = vrot.slane %v605, %v1262
  %v1264 = vsel %vm943, %v1263, %v1259
  %v1265 = vlaneseq
  %v1266 = vshrl.u32 %v1265, 7
  %v1267 = vsub.s32 %v945, %v1266
  %v1268 = vrot.slane %v606, %v1267
  %v1269 = vsel %vm950, %v1268, %v1264
  %v1270 = vlaneseq
  %v1271 = vshrl.u32 %v1270, 7
  %v1272 = vsub.s32 %v952, %v1271
  %v1273 = vrot.slane %v607, %v1272
  %v1274 = vsel %vm957, %v1273, %v1269
  %v1275 = vlaneseq
  %v1276 = vshrl.u32 %v1275, 7
  %v1277 = vsub.s32 %v849, %v1276
  %v1278 = vrot.slane %v608, %v1277
  %v1279 = vlaneseq
  %v1280 = vshrl.u32 %v1279, 7
  %v1281 = vsub.s32 %v854, %v1280
  %v1282 = vrot.slane %v609, %v1281
  %v1283 = vsel %vm859, %v1282, %v1278
  %v1284 = vlaneseq
  %v1285 = vshrl.u32 %v1284, 7
  %v1286 = vsub.s32 %v861, %v1285
  %v1287 = vrot.slane %v610, %v1286
  %v1288 = vsel %vm866, %v1287, %v1283
  %v1289 = vlaneseq
  %v1290 = vshrl.u32 %v1289, 7
  %v1291 = vsub.s32 %v868, %v1290
  %v1292 = vrot.slane %v611, %v1291
  %v1293 = vsel %vm873, %v1292, %v1288
  %v1294 = vlaneseq
  %v1295 = vshrl.u32 %v1294, 7
  %v1296 = vsub.s32 %v875, %v1295
  %v1297 = vrot.slane %v612, %v1296
  %v1298 = vsel %vm880, %v1297, %v1293
  %v1299 = vlaneseq
  %v1300 = vshrl.u32 %v1299, 7
  %v1301 = vsub.s32 %v882, %v1300
  %v1302 = vrot.slane %v613, %v1301
  %v1303 = vsel %vm887, %v1302, %v1298
  %v1304 = vlaneseq
  %v1305 = vshrl.u32 %v1304, 7
  %v1306 = vsub.s32 %v889, %v1305
  %v1307 = vrot.slane %v614, %v1306
  %v1308 = vsel %vm894, %v1307, %v1303
  %v1309 = vlaneseq
  %v1310 = vshrl.u32 %v1309, 7
  %v1311 = vsub.s32 %v896, %v1310
  %v1312 = vrot.slane %v615, %v1311
  %v1313 = vsel %vm901, %v1312, %v1308
  %v1314 = vlaneseq
  %v1315 = vshrl.u32 %v1314, 7
  %v1316 = vsub.s32 %v903, %v1315
  %v1317 = vrot.slane %v616, %v1316
  %v1318 = vsel %vm908, %v1317, %v1313
  %v1319 = vlaneseq
  %v1320 = vshrl.u32 %v1319, 7
  %v1321 = vsub.s32 %v910, %v1320
  %v1322 = vrot.slane %v617, %v1321
  %v1323 = vsel %vm915, %v1322, %v1318
  %v1324 = vlaneseq
  %v1325 = vshrl.u32 %v1324, 7
  %v1326 = vsub.s32 %v917, %v1325
  %v1327 = vrot.slane %v618, %v1326
  %v1328 = vsel %vm922, %v1327, %v1323
  %v1329 = vlaneseq
  %v1330 = vshrl.u32 %v1329, 7
  %v1331 = vsub.s32 %v924, %v1330
  %v1332 = vrot.slane %v619, %v1331
  %v1333 = vsel %vm929, %v1332, %v1328
  %v1334 = vlaneseq
  %v1335 = vshrl.u32 %v1334, 7
  %v1336 = vsub.s32 %v931, %v1335
  %v1337 = vrot.slane %v620, %v1336
  %v1338 = vsel %vm936, %v1337, %v1333
  %v1339 = vlaneseq
  %v1340 = vshrl.u32 %v1339, 7
  %v1341 = vsub.s32 %v938, %v1340
  %v1342 = vrot.slane %v621, %v1341
  %v1343 = vsel %vm943, %v1342, %v1338
  %v1344 = vlaneseq
  %v1345 = vshrl.u32 %v1344, 7
  %v1346 = vsub.s32 %v945, %v1345
  %v1347 = vrot.slane %v622, %v1346
  %v1348 = vsel %vm950, %v1347, %v1343
  %v1349 = vlaneseq
  %v1350 = vshrl.u32 %v1349, 7
  %v1351 = vsub.s32 %v952, %v1350
  %v1352 = vrot.slane %v623, %v1351
  %v1353 = vsel %vm957, %v1352, %v1348
  %v1354 = vlaneseq
  %v1355 = vshrl.u32 %v1354, 7
  %v1356 = vsub.s32 %v849, %v1355
  %v1357 = vrot.slane %v624, %v1356
  %v1358 = vlaneseq
  %v1359 = vshrl.u32 %v1358, 7
  %v1360 = vsub.s32 %v854, %v1359
  %v1361 = vrot.slane %v625, %v1360
  %v1362 = vsel %vm859, %v1361, %v1357
  %v1363 = vlaneseq
  %v1364 = vshrl.u32 %v1363, 7
  %v1365 = vsub.s32 %v861, %v1364
  %v1366 = vrot.slane %v626, %v1365
  %v1367 = vsel %vm866, %v1366, %v1362
  %v1368 = vlaneseq
  %v1369 = vshrl.u32 %v1368, 7
  %v1370 = vsub.s32 %v868, %v1369
  %v1371 = vrot.slane %v627, %v1370
  %v1372 = vsel %vm873, %v1371, %v1367
  %v1373 = vlaneseq
  %v1374 = vshrl.u32 %v1373, 7
  %v1375 = vsub.s32 %v875, %v1374
  %v1376 = vrot.slane %v628, %v1375
  %v1377 = vsel %vm880, %v1376, %v1372
  %v1378 = vlaneseq
  %v1379 = vshrl.u32 %v1378, 7
  %v1380 = vsub.s32 %v882, %v1379
  %v1381 = vrot.slane %v629, %v1380
  %v1382 = vsel %vm887, %v1381, %v1377
  %v1383 = vlaneseq
  %v1384 = vshrl.u32 %v1383, 7
  %v1385 = vsub.s32 %v889, %v1384
  %v1386 = vrot.slane %v630, %v1385
  %v1387 = vsel %vm894, %v1386, %v1382
  %v1388 = vlaneseq
  %v1389 = vshrl.u32 %v1388, 7
  %v1390 = vsub.s32 %v896, %v1389
  %v1391 = vrot.slane %v631, %v1390
  %v1392 = vsel %vm901, %v1391, %v1387
  %v1393 = vlaneseq
  %v1394 = vshrl.u32 %v1393, 7
  %v1395 = vsub.s32 %v903, %v1394
  %v1396 = vrot.slane %v632, %v1395
  %v1397 = vsel %vm908, %v1396, %v1392
  %v1398 = vlaneseq
  %v1399 = vshrl.u32 %v1398, 7
  %v1400 = vsub.s32 %v910, %v1399
  %v1401 = vrot.slane %v633, %v1400
  %v1402 = vsel %vm915, %v1401, %v1397
  %v1403 = vlaneseq
  %v1404 = vshrl.u32 %v1403, 7
  %v1405 = vsub.s32 %v917, %v1404
  %v1406 = vrot.slane %v634, %v1405
  %v1407 = vsel %vm922, %v1406, %v1402
  %v1408 = vlaneseq
  %v1409 = vshrl.u32 %v1408, 7
  %v1410 = vsub.s32 %v924, %v1409
  %v1411 = vrot.slane %v635, %v1410
  %v1412 = vsel %vm929, %v1411, %v1407
  %v1413 = vlaneseq
  %v1414 = vshrl.u32 %v1413, 7
  %v1415 = vsub.s32 %v931, %v1414
  %v1416 = vrot.slane %v636, %v1415
  %v1417 = vsel %vm936, %v1416, %v1412
  %v1418 = vlaneseq
  %v1419 = vshrl.u32 %v1418, 7
  %v1420 = vsub.s32 %v938, %v1419
  %v1421 = vrot.slane %v637, %v1420
  %v1422 = vsel %vm943, %v1421, %v1417
  %v1423 = vlaneseq
  %v1424 = vshrl.u32 %v1423, 7
  %v1425 = vsub.s32 %v945, %v1424
  %v1426 = vrot.slane %v638, %v1425
  %v1427 = vsel %vm950, %v1426, %v1422
  %v1428 = vlaneseq
  %v1429 = vshrl.u32 %v1428, 7
  %v1430 = vsub.s32 %v952, %v1429
  %v1431 = vrot.slane %v639, %v1430
  %v1432 = vsel %vm957, %v1431, %v1427
  %v1433 = vlaneseq
  %v1434 = vshrl.u32 %v1433, 7
  %v1435 = vsub.s32 %v849, %v1434
  %v1436 = vrot.slane %v640, %v1435
  %v1437 = vlaneseq
  %v1438 = vshrl.u32 %v1437, 7
  %v1439 = vsub.s32 %v854, %v1438
  %v1440 = vrot.slane %v641, %v1439
  %v1441 = vsel %vm859, %v1440, %v1436
  %v1442 = vlaneseq
  %v1443 = vshrl.u32 %v1442, 7
  %v1444 = vsub.s32 %v861, %v1443
  %v1445 = vrot.slane %v642, %v1444
  %v1446 = vsel %vm866, %v1445, %v1441
  %v1447 = vlaneseq
  %v1448 = vshrl.u32 %v1447, 7
  %v1449 = vsub.s32 %v868, %v1448
  %v1450 = vrot.slane %v643, %v1449
  %v1451 = vsel %vm873, %v1450, %v1446
  %v1452 = vlaneseq
  %v1453 = vshrl.u32 %v1452, 7
  %v1454 = vsub.s32 %v875, %v1453
  %v1455 = vrot.slane %v644, %v1454
  %v1456 = vsel %vm880, %v1455, %v1451
  %v1457 = vlaneseq
  %v1458 = vshrl.u32 %v1457, 7
  %v1459 = vsub.s32 %v882, %v1458
  %v1460 = vrot.slane %v645, %v1459
  %v1461 = vsel %vm887, %v1460, %v1456
  %v1462 = vlaneseq
  %v1463 = vshrl.u32 %v1462, 7
  %v1464 = vsub.s32 %v889, %v1463
  %v1465 = vrot.slane %v646, %v1464
  %v1466 = vsel %vm894, %v1465, %v1461
  %v1467 = vlaneseq
  %v1468 = vshrl.u32 %v1467, 7
  %v1469 = vsub.s32 %v896, %v1468
  %v1470 = vrot.slane %v647, %v1469
  %v1471 = vsel %vm901, %v1470, %v1466
  %v1472 = vlaneseq
  %v1473 = vshrl.u32 %v1472, 7
  %v1474 = vsub.s32 %v903, %v1473
  %v1475 = vrot.slane %v648, %v1474
  %v1476 = vsel %vm908, %v1475, %v1471
  %v1477 = vlaneseq
  %v1478 = vshrl.u32 %v1477, 7
  %v1479 = vsub.s32 %v910, %v1478
  %v1480 = vrot.slane %v649, %v1479
  %v1481 = vsel %vm915, %v1480, %v1476
  %v1482 = vlaneseq
  %v1483 = vshrl.u32 %v1482, 7
  %v1484 = vsub.s32 %v917, %v1483
  %v1485 = vrot.slane %v650, %v1484
  %v1486 = vsel %vm922, %v1485, %v1481
  %v1487 = vlaneseq
  %v1488 = vshrl.u32 %v1487, 7
  %v1489 = vsub.s32 %v924, %v1488
  %v1490 = vrot.slane %v651, %v1489
  %v1491 = vsel %vm929, %v1490, %v1486
  %v1492 = vlaneseq
  %v1493 = vshrl.u32 %v1492, 7
  %v1494 = vsub.s32 %v931, %v1493
  %v1495 = vrot.slane %v652, %v1494
  %v1496 = vsel %vm936, %v1495, %v1491
  %v1497 = vlaneseq
  %v1498 = vshrl.u32 %v1497, 7
  %v1499 = vsub.s32 %v938, %v1498
  %v1500 = vrot.slane %v653, %v1499
  %v1501 = vsel %vm943, %v1500, %v1496
  %v1502 = vlaneseq
  %v1503 = vshrl.u32 %v1502, 7
  %v1504 = vsub.s32 %v945, %v1503
  %v1505 = vrot.slane %v654, %v1504
  %v1506 = vsel %vm950, %v1505, %v1501
  %v1507 = vlaneseq
  %v1508 = vshrl.u32 %v1507, 7
  %v1509 = vsub.s32 %v952, %v1508
  %v1510 = vrot.slane %v655, %v1509
  %v1511 = vsel %vm957, %v1510, %v1506
  %vm1512 = vcmask 1041409
  %v1513 = vsel %vm1512, %v1274, %v958
  %v1514 = vsel %vm1512, %v1353, %v1037
  %v1515 = vsel %vm1512, %v1432, %v1116
  %v1516 = vsel %vm1512, %v1511, %v1195
  %1521 = vmatprep.subr.mxu0 0.0
  %1522 = vmatpush1.msra.mxu0 %v656
  %1523 = vmatprep.subr.mxu0 0.0
  %1524 = vmatpush1.msra.mxu0 %v657
  %1525 = vmatprep.subr.mxu0 0.0
  %1526 = vmatpush1.msra.mxu0 %v658
  %1527 = vmatprep.subr.mxu0 0.0
  %1528 = vmatpush1.msra.mxu0 %v659
  %1529 = vmatprep.subr.mxu0 0.0
  %1530 = vmatpush1.msra.mxu0 %v660
  %1531 = vmatprep.subr.mxu0 0.0
  %1532 = vmatpush1.msra.mxu0 %v661
  %1533 = vmatprep.subr.mxu0 0.0
  %1534 = vmatpush1.msra.mxu0 %v662
  %1535 = vmatprep.subr.mxu0 0.0
  %1536 = vmatpush1.msra.mxu0 %v663
  %1537 = vmatprep.subr.mxu0 0.0
  %1538 = vmatpush1.msra.mxu0 %v664
  %1539 = vmatprep.subr.mxu0 0.0
  %1540 = vmatpush1.msra.mxu0 %v665
  %1541 = vmatprep.subr.mxu0 0.0
  %1542 = vmatpush1.msra.mxu0 %v666
  %1543 = vmatprep.subr.mxu0 0.0
  %1544 = vmatpush1.msra.mxu0 %v667
  %1545 = vmatprep.subr.mxu0 0.0
  %1546 = vmatpush1.msra.mxu0 %v668
  %1547 = vmatprep.subr.mxu0 0.0
  %1548 = vmatpush1.msra.mxu0 %v669
  %1549 = vmatprep.subr.mxu0 0.0
  %1550 = vmatpush1.msra.mxu0 %v670
  %1551 = vmatprep.subr.mxu0 0.0
  %1552 = vmatpush1.msra.mxu0 %v671
  %1553 = vmatprep.subr.mxu0 0.0
  %1554 = vmatpush1.msra.mxu0 %v672
  %1555 = vmatprep.subr.mxu0 0.0
  %1556 = vmatpush1.msra.mxu0 %v673
  %1557 = vmatprep.subr.mxu0 0.0
  %1558 = vmatpush1.msra.mxu0 %v674
  %1559 = vmatprep.subr.mxu0 0.0
  %1560 = vmatpush1.msra.mxu0 %v675
  %1561 = vmatprep.subr.mxu0 0.0
  %1562 = vmatpush1.msra.mxu0 %v676
  %1563 = vmatprep.subr.mxu0 0.0
  %1564 = vmatpush1.msra.mxu0 %v677
  %1565 = vmatprep.subr.mxu0 0.0
  %1566 = vmatpush1.msra.mxu0 %v678
  %1567 = vmatprep.subr.mxu0 0.0
  %1568 = vmatpush1.msra.mxu0 %v679
  %1569 = vmatprep.subr.mxu0 0.0
  %1570 = vmatpush1.msra.mxu0 %v680
  %1571 = vmatprep.subr.mxu0 0.0
  %1572 = vmatpush1.msra.mxu0 %v681
  %1573 = vmatprep.subr.mxu0 0.0
  %1574 = vmatpush1.msra.mxu0 %v682
  %1575 = vmatprep.subr.mxu0 0.0
  %1576 = vmatpush1.msra.mxu0 %v683
  %1577 = vmatprep.subr.mxu0 0.0
  %1578 = vmatpush1.msra.mxu0 %v684
  %1579 = vmatprep.subr.mxu0 0.0
  %1580 = vmatpush1.msra.mxu0 %v685
  %1581 = vmatprep.subr.mxu0 0.0
  %1582 = vmatpush1.msra.mxu0 %v686
  %1583 = vmatprep.subr.mxu0 0.0
  %1584 = vmatpush1.msra.mxu0 %v687
  %1585 = vmatprep.mubr.f32.mxu0 %v1514
  %1586 = vmatmul.mubr.f32.gmra.mrb[0].mxu0 %v1513
  %v1587 = vpop.f32.mrb[0].mxu0
  %v1588 = vadd.f32 0.0, %v1587
  %v1589 = vpop.f32.mrb[0].mxu0
  %1590 = vdwg.mxu0
  %1591 = vmatprep.subr.mxu0 0.0
  %1592 = vmatpush1.msra.mxu0 %v688
  %1593 = vmatprep.subr.mxu0 0.0
  %1594 = vmatpush1.msra.mxu0 %v689
  %1595 = vmatprep.subr.mxu0 0.0
  %1596 = vmatpush1.msra.mxu0 %v690
  %1597 = vmatprep.subr.mxu0 0.0
  %1598 = vmatpush1.msra.mxu0 %v691
  %1599 = vmatprep.subr.mxu0 0.0
  %1600 = vmatpush1.msra.mxu0 %v692
  %1601 = vmatprep.subr.mxu0 0.0
  %1602 = vmatpush1.msra.mxu0 %v693
  %1603 = vmatprep.subr.mxu0 0.0
  %1604 = vmatpush1.msra.mxu0 %v694
  %1605 = vmatprep.subr.mxu0 0.0
  %1606 = vmatpush1.msra.mxu0 %v695
  %1607 = vmatprep.subr.mxu0 0.0
  %1608 = vmatpush1.msra.mxu0 %v696
  %1609 = vmatprep.subr.mxu0 0.0
  %1610 = vmatpush1.msra.mxu0 %v697
  %1611 = vmatprep.subr.mxu0 0.0
  %1612 = vmatpush1.msra.mxu0 %v698
  %1613 = vmatprep.subr.mxu0 0.0
  %1614 = vmatpush1.msra.mxu0 %v699
  %1615 = vmatprep.subr.mxu0 0.0
  %1616 = vmatpush1.msra.mxu0 %v700
  %1617 = vmatprep.subr.mxu0 0.0
  %1618 = vmatpush1.msra.mxu0 %v701
  %1619 = vmatprep.subr.mxu0 0.0
  %1620 = vmatpush1.msra.mxu0 %v702
  %1621 = vmatprep.subr.mxu0 0.0
  %1622 = vmatpush1.msra.mxu0 %v703
  %1623 = vmatprep.subr.mxu0 0.0
  %1624 = vmatpush1.msra.mxu0 %v704
  %1625 = vmatprep.subr.mxu0 0.0
  %1626 = vmatpush1.msra.mxu0 %v705
  %1627 = vmatprep.subr.mxu0 0.0
  %1628 = vmatpush1.msra.mxu0 %v706
  %1629 = vmatprep.subr.mxu0 0.0
  %1630 = vmatpush1.msra.mxu0 %v707
  %1631 = vmatprep.subr.mxu0 0.0
  %1632 = vmatpush1.msra.mxu0 %v708
  %1633 = vmatprep.subr.mxu0 0.0
  %1634 = vmatpush1.msra.mxu0 %v709
  %1635 = vmatprep.subr.mxu0 0.0
  %1636 = vmatpush1.msra.mxu0 %v710
  %1637 = vmatprep.subr.mxu0 0.0
  %1638 = vmatpush1.msra.mxu0 %v711
  %1639 = vmatprep.subr.mxu0 0.0
  %1640 = vmatpush1.msra.mxu0 %v712
  %1641 = vmatprep.subr.mxu0 0.0
  %1642 = vmatpush1.msra.mxu0 %v713
  %1643 = vmatprep.subr.mxu0 0.0
  %1644 = vmatpush1.msra.mxu0 %v714
  %1645 = vmatprep.subr.mxu0 0.0
  %1646 = vmatpush1.msra.mxu0 %v715
  %1647 = vmatprep.subr.mxu0 0.0
  %1648 = vmatpush1.msra.mxu0 %v716
  %1649 = vmatprep.subr.mxu0 0.0
  %1650 = vmatpush1.msra.mxu0 %v717
  %1651 = vmatprep.subr.mxu0 0.0
  %1652 = vmatpush1.msra.mxu0 %v718
  %1653 = vmatprep.subr.mxu0 0.0
  %1654 = vmatpush1.msra.mxu0 %v719
  %1655 = vmatprep.mubr.f32.mxu0 %v1516
  %1656 = vmatmul.mubr.f32.gmra.mrb[0].mxu0 %v1515
  %v1657 = vpop.f32.mrb[0].mxu0
  %v1658 = vadd.f32 %v1588, %v1657
  %v1659 = vpop.f32.mrb[0].mxu0
  %1660 = vdwg.mxu0
  %v1661 = vmax.f32 %v1658, 0.0
  %v1662 = vld [vmem:[%s2] sm:$0xff]
  %v1663 = vld [vmem:[%s2 + $0x8] sm:$0xff]
  %v1664 = vld [vmem:[%s2 + $0x10] sm:$0xff]
  %v1665 = vld [vmem:[%s2 + $0x18] sm:$0xff]
  %v1666 = vld [vmem:[%s2 + $0x20] sm:$0xff]
  %v1667 = vld [vmem:[%s2 + $0x28] sm:$0xff]
  %v1668 = vld [vmem:[%s2 + $0x30] sm:$0xff]
  %v1669 = vld [vmem:[%s2 + $0x38] sm:$0xff]
  %v1670 = vld [vmem:[%s2 + $0x40] sm:$0xff]
  %v1671 = vld [vmem:[%s2 + $0x48] sm:$0xff]
  %v1672 = vld [vmem:[%s2 + $0x50] sm:$0xff]
  %v1673 = vld [vmem:[%s2 + $0x58] sm:$0xff]
  %v1674 = vld [vmem:[%s2 + $0x60] sm:$0xff]
  %v1675 = vld [vmem:[%s2 + $0x68] sm:$0xff]
  %v1676 = vld [vmem:[%s2 + $0x70] sm:$0xff]
  %v1677 = vld [vmem:[%s2 + $0x78] sm:$0xff]
  %vm1678 = vcmask 261120
  %v1680 = vsel %vm1678, %v1661, 0
  %1682 = vmatprep.subr.mxu0 %v1663
  %1683 = vmatpush1.msra.mxu0 %v1662
  %1684 = vmatprep.subr.mxu0 %v1667
  %1685 = vmatpush1.msra.mxu0 %v1666
  %1686 = vmatprep.subr.mxu0 %v1671
  %1687 = vmatpush1.msra.mxu0 %v1670
  %1688 = vmatprep.subr.mxu0 %v1675
  %1689 = vmatpush1.msra.mxu0 %v1674
  %1690 = vmatprep.subr.mxu0 0.0
  %1691 = vmatpush1.msra.mxu0 0.0
  %1692 = vmatprep.subr.mxu0 0.0
  %1693 = vmatpush1.msra.mxu0 0.0
  %1694 = vmatprep.subr.mxu0 0.0
  %1695 = vmatpush1.msra.mxu0 0.0
  %1696 = vmatprep.subr.mxu0 0.0
  %1697 = vmatpush1.msra.mxu0 0.0
  %1698 = vmatprep.subr.mxu0 0.0
  %1699 = vmatpush1.msra.mxu0 0.0
  %1700 = vmatprep.subr.mxu0 0.0
  %1701 = vmatpush1.msra.mxu0 0.0
  %1702 = vmatprep.subr.mxu0 0.0
  %1703 = vmatpush1.msra.mxu0 0.0
  %1704 = vmatprep.subr.mxu0 0.0
  %1705 = vmatpush1.msra.mxu0 0.0
  %1706 = vmatprep.subr.mxu0 0.0
  %1707 = vmatpush1.msra.mxu0 0.0
  %1708 = vmatprep.subr.mxu0 0.0
  %1709 = vmatpush1.msra.mxu0 0.0
  %1710 = vmatprep.subr.mxu0 0.0
  %1711 = vmatpush1.msra.mxu0 0.0
  %1712 = vmatprep.subr.mxu0 0.0
  %1713 = vmatpush1.msra.mxu0 0.0
  %1714 = vmatprep.subr.mxu0 0.0
  %1715 = vmatpush1.msra.mxu0 0.0
  %1716 = vmatprep.subr.mxu0 0.0
  %1717 = vmatpush1.msra.mxu0 0.0
  %1718 = vmatprep.subr.mxu0 0.0
  %1719 = vmatpush1.msra.mxu0 0.0
  %1720 = vmatprep.subr.mxu0 0.0
  %1721 = vmatpush1.msra.mxu0 0.0
  %1722 = vmatprep.subr.mxu0 0.0
  %1723 = vmatpush1.msra.mxu0 0.0
  %1724 = vmatprep.subr.mxu0 0.0
  %1725 = vmatpush1.msra.mxu0 0.0
  %1726 = vmatprep.subr.mxu0 0.0
  %1727 = vmatpush1.msra.mxu0 0.0
  %1728 = vmatprep.subr.mxu0 0.0
  %1729 = vmatpush1.msra.mxu0 0.0
  %1730 = vmatprep.subr.mxu0 0.0
  %1731 = vmatpush1.msra.mxu0 0.0
  %1732 = vmatprep.subr.mxu0 0.0
  %1733 = vmatpush1.msra.mxu0 0.0
  %1734 = vmatprep.subr.mxu0 0.0
  %1735 = vmatpush1.msra.mxu0 0.0
  %1736 = vmatprep.subr.mxu0 0.0
  %1737 = vmatpush1.msra.mxu0 0.0
  %1738 = vmatprep.subr.mxu0 0.0
  %1739 = vmatpush1.msra.mxu0 0.0
  %1740 = vmatprep.subr.mxu0 0.0
  %1741 = vmatpush1.msra.mxu0 0.0
  %1742 = vmatprep.subr.mxu0 0.0
  %1743 = vmatpush1.msra.mxu0 0.0
  %1744 = vmatprep.subr.mxu0 0.0
  %1745 = vmatpush1.msra.mxu0 0.0
  %1746 = vmatprep.mubr.f32.mxu0 0.0
  %1747 = vmatmul.mubr.f32.gmra.mrb[0].mxu0 %v1680
  %v1748 = vpop.f32.mrb[0].mxu0
  %v1749 = vadd.f32 0.0, %v1748
  %v1750 = vpop.f32.mrb[0].mxu0
  %v1751 = vadd.f32 0.0, %v1750
  %1752 = vdwg.mxu0
  %1753 = vmatprep.subr.mxu0 %v1665
  %1754 = vmatpush1.msra.mxu0 %v1664
  %1755 = vmatprep.subr.mxu0 %v1669
  %1756 = vmatpush1.msra.mxu0 %v1668
  %1757 = vmatprep.subr.mxu0 %v1673
  %1758 = vmatpush1.msra.mxu0 %v1672
  %1759 = vmatprep.subr.mxu0 %v1677
  %1760 = vmatpush1.msra.mxu0 %v1676
  %1761 = vmatprep.subr.mxu0 0.0
  %1762 = vmatpush1.msra.mxu0 0.0
  %1763 = vmatprep.subr.mxu0 0.0
  %1764 = vmatpush1.msra.mxu0 0.0
  %1765 = vmatprep.subr.mxu0 0.0
  %1766 = vmatpush1.msra.mxu0 0.0
  %1767 = vmatprep.subr.mxu0 0.0
  %1768 = vmatpush1.msra.mxu0 0.0
  %1769 = vmatprep.subr.mxu0 0.0
  %1770 = vmatpush1.msra.mxu0 0.0
  %1771 = vmatprep.subr.mxu0 0.0
  %1772 = vmatpush1.msra.mxu0 0.0
  %1773 = vmatprep.subr.mxu0 0.0
  %1774 = vmatpush1.msra.mxu0 0.0
  %1775 = vmatprep.subr.mxu0 0.0
  %1776 = vmatpush1.msra.mxu0 0.0
  %1777 = vmatprep.subr.mxu0 0.0
  %1778 = vmatpush1.msra.mxu0 0.0
  %1779 = vmatprep.subr.mxu0 0.0
  %1780 = vmatpush1.msra.mxu0 0.0
  %1781 = vmatprep.subr.mxu0 0.0
  %1782 = vmatpush1.msra.mxu0 0.0
  %1783 = vmatprep.subr.mxu0 0.0
  %1784 = vmatpush1.msra.mxu0 0.0
  %1785 = vmatprep.subr.mxu0 0.0
  %1786 = vmatpush1.msra.mxu0 0.0
  %1787 = vmatprep.subr.mxu0 0.0
  %1788 = vmatpush1.msra.mxu0 0.0
  %1789 = vmatprep.subr.mxu0 0.0
  %1790 = vmatpush1.msra.mxu0 0.0
  %1791 = vmatprep.subr.mxu0 0.0
  %1792 = vmatpush1.msra.mxu0 0.0
  %1793 = vmatprep.subr.mxu0 0.0
  %1794 = vmatpush1.msra.mxu0 0.0
  %1795 = vmatprep.subr.mxu0 0.0
  %1796 = vmatpush1.msra.mxu0 0.0
  %1797 = vmatprep.subr.mxu0 0.0
  %1798 = vmatpush1.msra.mxu0 0.0
  %1799 = vmatprep.subr.mxu0 0.0
  %1800 = vmatpush1.msra.mxu0 0.0
  %1801 = vmatprep.subr.mxu0 0.0
  %1802 = vmatpush1.msra.mxu0 0.0
  %1803 = vmatprep.subr.mxu0 0.0
  %1804 = vmatpush1.msra.mxu0 0.0
  %1805 = vmatprep.subr.mxu0 0.0
  %1806 = vmatpush1.msra.mxu0 0.0
  %1807 = vmatprep.subr.mxu0 0.0
  %1808 = vmatpush1.msra.mxu0 0.0
  %1809 = vmatprep.subr.mxu0 0.0
  %1810 = vmatpush1.msra.mxu0 0.0
  %1811 = vmatprep.subr.mxu0 0.0
  %1812 = vmatpush1.msra.mxu0 0.0
  %1813 = vmatprep.subr.mxu0 0.0
  %1814 = vmatpush1.msra.mxu0 0.0
  %1815 = vmatprep.subr.mxu0 0.0
  %1816 = vmatpush1.msra.mxu0 0.0
  %1817 = vmatprep.mubr.f32.mxu0 0.0
  %1818 = vmatmul.mubr.f32.gmra.mrb[0].mxu0 %v1680
  %v1819 = vpop.f32.mrb[0].mxu0
  %v1820 = vadd.f32 0.0, %v1819
  %v1821 = vpop.f32.mrb[0].mxu0
  %v1822 = vadd.f32 0.0, %v1821
  %1823 = vdwg.mxu0
  %v1824 = vxor.u32 %v1749, 2147483648
  %v1825 = vxor.u32 %v1751, 2147483648
  %v1826 = vxor.u32 %v1820, 2147483648
  %v1827 = vxor.u32 %v1822, 2147483648
  %v1828 = vmul.f32 %v1824, 1.442695
  %v1829 = vpow.pop %v1828
  %v1830 = vmul.f32 %v1825, 1.442695
  %v1831 = vpow.pop %v1830
  %v1832 = vmul.f32 %v1826, 1.442695
  %v1833 = vpow.pop %v1832
  %v1834 = vmul.f32 %v1827, 1.442695
  %v1835 = vpow.pop %v1834
  %v1836 = vadd.f32 %v1829, 1.0
  %v1837 = vadd.f32 %v1831, 1.0
  %v1838 = vadd.f32 %v1833, 1.0
  %v1839 = vadd.f32 %v1835, 1.0
  %v1840 = vrcp.pop %v1836
  %v1841 = vmul.f32 1.0, %v1840
  %v1842 = vrcp.pop %v1837
  %v1843 = vmul.f32 1.0, %v1842
  %v1844 = vrcp.pop %v1838
  %v1845 = vmul.f32 1.0, %v1844
  %v1846 = vrcp.pop %v1839
  %v1847 = vmul.f32 1.0, %v1846
  %v1848 = vlaneseq
  %v1849 = vshrl.u32 %v1848, 7
  %v1850 = vsub.s32 0, %v1849
  %v1851 = vrot.slane %v1841, %v1850
  %1853 = vbcast.lane.b32.xlu0 %v1851, 256
  %v1854 = vpop.permute.xlu0 %1853
  %s1856 = sor.u32 256, 8
  %1857 = vbcast.lane.b32.xlu0 %v1851, %s1856
  %v1858 = vpop.permute.xlu0 %1857
  %s1860 = sor.u32 256, 16
  %1861 = vbcast.lane.b32.xlu0 %v1851, %s1860
  %v1862 = vpop.permute.xlu0 %1861
  %s1864 = sor.u32 256, 24
  %1865 = vbcast.lane.b32.xlu0 %v1851, %s1864
  %v1866 = vpop.permute.xlu0 %1865
  %s1868 = sor.u32 256, 32
  %1869 = vbcast.lane.b32.xlu0 %v1851, %s1868
  %v1870 = vpop.permute.xlu0 %1869
  %s1872 = sor.u32 256, 40
  %1873 = vbcast.lane.b32.xlu0 %v1851, %s1872
  %v1874 = vpop.permute.xlu0 %1873
  %s1876 = sor.u32 256, 48
  %1877 = vbcast.lane.b32.xlu0 %v1851, %s1876
  %v1878 = vpop.permute.xlu0 %1877
  %s1880 = sor.u32 256, 56
  %1881 = vbcast.lane.b32.xlu0 %v1851, %s1880
  %v1882 = vpop.permute.xlu0 %1881
  %s1884 = sor.u32 256, 64
  %1885 = vbcast.lane.b32.xlu0 %v1851, %s1884
  %v1886 = vpop.permute.xlu0 %1885
  %s1888 = sor.u32 256, 72
  %1889 = vbcast.lane.b32.xlu0 %v1851, %s1888
  %v1890 = vpop.permute.xlu0 %1889
  %s1892 = sor.u32 256, 80
  %1893 = vbcast.lane.b32.xlu0 %v1851, %s1892
  %v1894 = vpop.permute.xlu0 %1893
  %s1896 = sor.u32 256, 88
  %1897 = vbcast.lane.b32.xlu0 %v1851, %s1896
  %v1898 = vpop.permute.xlu0 %1897
  %s1900 = sor.u32 256, 96
  %1901 = vbcast.lane.b32.xlu0 %v1851, %s1900
  %v1902 = vpop.permute.xlu0 %1901
  %s1904 = sor.u32 256, 104
  %1905 = vbcast.lane.b32.xlu0 %v1851, %s1904
  %v1906 = vpop.permute.xlu0 %1905
  %s1908 = sor.u32 256, 112
  %1909 = vbcast.lane.b32.xlu0 %v1851, %s1908
  %v1910 = vpop.permute.xlu0 %1909
  %s1912 = sor.u32 256, 120
  %1913 = vbcast.lane.b32.xlu0 %v1851, %s1912
  %v1914 = vpop.permute.xlu0 %1913
  %v1915 = vlaneseq
  %v1916 = vshrl.u32 %v1915, 7
  %v1917 = vsub.s32 0, %v1916
  %v1918 = vrot.slane %v1843, %v1917
  %1920 = vbcast.lane.b32.xlu0 %v1918, 256
  %v1921 = vpop.permute.xlu0 %1920
  %s1923 = sor.u32 256, 8
  %1924 = vbcast.lane.b32.xlu0 %v1918, %s1923
  %v1925 = vpop.permute.xlu0 %1924
  %s1927 = sor.u32 256, 16
  %1928 = vbcast.lane.b32.xlu0 %v1918, %s1927
  %v1929 = vpop.permute.xlu0 %1928
  %s1931 = sor.u32 256, 24
  %1932 = vbcast.lane.b32.xlu0 %v1918, %s1931
  %v1933 = vpop.permute.xlu0 %1932
  %s1935 = sor.u32 256, 32
  %1936 = vbcast.lane.b32.xlu0 %v1918, %s1935
  %v1937 = vpop.permute.xlu0 %1936
  %s1939 = sor.u32 256, 40
  %1940 = vbcast.lane.b32.xlu0 %v1918, %s1939
  %v1941 = vpop.permute.xlu0 %1940
  %s1943 = sor.u32 256, 48
  %1944 = vbcast.lane.b32.xlu0 %v1918, %s1943
  %v1945 = vpop.permute.xlu0 %1944
  %s1947 = sor.u32 256, 56
  %1948 = vbcast.lane.b32.xlu0 %v1918, %s1947
  %v1949 = vpop.permute.xlu0 %1948
  %s1951 = sor.u32 256, 64
  %1952 = vbcast.lane.b32.xlu0 %v1918, %s1951
  %v1953 = vpop.permute.xlu0 %1952
  %s1955 = sor.u32 256, 72
  %1956 = vbcast.lane.b32.xlu0 %v1918, %s1955
  %v1957 = vpop.permute.xlu0 %1956
  %s1959 = sor.u32 256, 80
  %1960 = vbcast.lane.b32.xlu0 %v1918, %s1959
  %v1961 = vpop.permute.xlu0 %1960
  %s1963 = sor.u32 256, 88
  %1964 = vbcast.lane.b32.xlu0 %v1918, %s1963
  %v1965 = vpop.permute.xlu0 %1964
  %s1967 = sor.u32 256, 96
  %1968 = vbcast.lane.b32.xlu0 %v1918, %s1967
  %v1969 = vpop.permute.xlu0 %1968
  %s1971 = sor.u32 256, 104
  %1972 = vbcast.lane.b32.xlu0 %v1918, %s1971
  %v1973 = vpop.permute.xlu0 %1972
  %s1975 = sor.u32 256, 112
  %1976 = vbcast.lane.b32.xlu0 %v1918, %s1975
  %v1977 = vpop.permute.xlu0 %1976
  %s1979 = sor.u32 256, 120
  %1980 = vbcast.lane.b32.xlu0 %v1918, %s1979
  %v1981 = vpop.permute.xlu0 %1980
  %v1982 = vlaneseq
  %v1983 = vshrl.u32 %v1982, 7
  %v1984 = vsub.s32 0, %v1983
  %v1985 = vrot.slane %v1845, %v1984
  %1987 = vbcast.lane.b32.xlu0 %v1985, 256
  %v1988 = vpop.permute.xlu0 %1987
  %s1990 = sor.u32 256, 8
  %1991 = vbcast.lane.b32.xlu0 %v1985, %s1990
  %v1992 = vpop.permute.xlu0 %1991
  %s1994 = sor.u32 256, 16
  %1995 = vbcast.lane.b32.xlu0 %v1985, %s1994
  %v1996 = vpop.permute.xlu0 %1995
  %s1998 = sor.u32 256, 24
  %1999 = vbcast.lane.b32.xlu0 %v1985, %s1998
  %v2000 = vpop.permute.xlu0 %1999
  %s2002 = sor.u32 256, 32
  %2003 = vbcast.lane.b32.xlu0 %v1985, %s2002
  %v2004 = vpop.permute.xlu0 %2003
  %s2006 = sor.u32 256, 40
  %2007 = vbcast.lane.b32.xlu0 %v1985, %s2006
  %v2008 = vpop.permute.xlu0 %2007
  %s2010 = sor.u32 256, 48
  %2011 = vbcast.lane.b32.xlu0 %v1985, %s2010
  %v2012 = vpop.permute.xlu0 %2011
  %s2014 = sor.u32 256, 56
  %2015 = vbcast.lane.b32.xlu0 %v1985, %s2014
  %v2016 = vpop.permute.xlu0 %2015
  %s2018 = sor.u32 256, 64
  %2019 = vbcast.lane.b32.xlu0 %v1985, %s2018
  %v2020 = vpop.permute.xlu0 %2019
  %s2022 = sor.u32 256, 72
  %2023 = vbcast.lane.b32.xlu0 %v1985, %s2022
  %v2024 = vpop.permute.xlu0 %2023
  %s2026 = sor.u32 256, 80
  %2027 = vbcast.lane.b32.xlu0 %v1985, %s2026
  %v2028 = vpop.permute.xlu0 %2027
  %s2030 = sor.u32 256, 88
  %2031 = vbcast.lane.b32.xlu0 %v1985, %s2030
  %v2032 = vpop.permute.xlu0 %2031
  %s2034 = sor.u32 256, 96
  %2035 = vbcast.lane.b32.xlu0 %v1985, %s2034
  %v2036 = vpop.permute.xlu0 %2035
  %s2038 = sor.u32 256, 104
  %2039 = vbcast.lane.b32.xlu0 %v1985, %s2038
  %v2040 = vpop.permute.xlu0 %2039
  %s2042 = sor.u32 256, 112
  %2043 = vbcast.lane.b32.xlu0 %v1985, %s2042
  %v2044 = vpop.permute.xlu0 %2043
  %s2046 = sor.u32 256, 120
  %2047 = vbcast.lane.b32.xlu0 %v1985, %s2046
  %v2048 = vpop.permute.xlu0 %2047
  %v2049 = vlaneseq
  %v2050 = vshrl.u32 %v2049, 7
  %v2051 = vsub.s32 0, %v2050
  %v2052 = vrot.slane %v1847, %v2051
  %2054 = vbcast.lane.b32.xlu0 %v2052, 256
  %v2055 = vpop.permute.xlu0 %2054
  %s2057 = sor.u32 256, 8
  %2058 = vbcast.lane.b32.xlu0 %v2052, %s2057
  %v2059 = vpop.permute.xlu0 %2058
  %s2061 = sor.u32 256, 16
  %2062 = vbcast.lane.b32.xlu0 %v2052, %s2061
  %v2063 = vpop.permute.xlu0 %2062
  %s2065 = sor.u32 256, 24
  %2066 = vbcast.lane.b32.xlu0 %v2052, %s2065
  %v2067 = vpop.permute.xlu0 %2066
  %s2069 = sor.u32 256, 32
  %2070 = vbcast.lane.b32.xlu0 %v2052, %s2069
  %v2071 = vpop.permute.xlu0 %2070
  %s2073 = sor.u32 256, 40
  %2074 = vbcast.lane.b32.xlu0 %v2052, %s2073
  %v2075 = vpop.permute.xlu0 %2074
  %s2077 = sor.u32 256, 48
  %2078 = vbcast.lane.b32.xlu0 %v2052, %s2077
  %v2079 = vpop.permute.xlu0 %2078
  %s2081 = sor.u32 256, 56
  %2082 = vbcast.lane.b32.xlu0 %v2052, %s2081
  %v2083 = vpop.permute.xlu0 %2082
  %s2085 = sor.u32 256, 64
  %2086 = vbcast.lane.b32.xlu0 %v2052, %s2085
  %v2087 = vpop.permute.xlu0 %2086
  %s2089 = sor.u32 256, 72
  %2090 = vbcast.lane.b32.xlu0 %v2052, %s2089
  %v2091 = vpop.permute.xlu0 %2090
  %s2093 = sor.u32 256, 80
  %2094 = vbcast.lane.b32.xlu0 %v2052, %s2093
  %v2095 = vpop.permute.xlu0 %2094
  %s2097 = sor.u32 256, 88
  %2098 = vbcast.lane.b32.xlu0 %v2052, %s2097
  %v2099 = vpop.permute.xlu0 %2098
  %s2101 = sor.u32 256, 96
  %2102 = vbcast.lane.b32.xlu0 %v2052, %s2101
  %v2103 = vpop.permute.xlu0 %2102
  %s2105 = sor.u32 256, 104
  %2106 = vbcast.lane.b32.xlu0 %v2052, %s2105
  %v2107 = vpop.permute.xlu0 %2106
  %s2109 = sor.u32 256, 112
  %2110 = vbcast.lane.b32.xlu0 %v2052, %s2109
  %v2111 = vpop.permute.xlu0 %2110
  %s2113 = sor.u32 256, 120
  %2114 = vbcast.lane.b32.xlu0 %v2052, %s2113
  %v2115 = vpop.permute.xlu0 %2114
  %v2116 = vlaneseq
  %v2117 = vshrl.u32 %v2116, 7
  %v2118 = vsub.s32 1, %v2117
  %v2119 = vrot.slane %v1841, %v2118
  %2121 = vbcast.lane.b32.xlu0 %v2119, 256
  %v2122 = vpop.permute.xlu0 %2121
  %s2124 = sor.u32 256, 8
  %2125 = vbcast.lane.b32.xlu0 %v2119, %s2124
  %v2126 = vpop.permute.xlu0 %2125
  %s2128 = sor.u32 256, 16
  %2129 = vbcast.lane.b32.xlu0 %v2119, %s2128
  %v2130 = vpop.permute.xlu0 %2129
  %s2132 = sor.u32 256, 24
  %2133 = vbcast.lane.b32.xlu0 %v2119, %s2132
  %v2134 = vpop.permute.xlu0 %2133
  %s2136 = sor.u32 256, 32
  %2137 = vbcast.lane.b32.xlu0 %v2119, %s2136
  %v2138 = vpop.permute.xlu0 %2137
  %s2140 = sor.u32 256, 40
  %2141 = vbcast.lane.b32.xlu0 %v2119, %s2140
  %v2142 = vpop.permute.xlu0 %2141
  %s2144 = sor.u32 256, 48
  %2145 = vbcast.lane.b32.xlu0 %v2119, %s2144
  %v2146 = vpop.permute.xlu0 %2145
  %s2148 = sor.u32 256, 56
  %2149 = vbcast.lane.b32.xlu0 %v2119, %s2148
  %v2150 = vpop.permute.xlu0 %2149
  %s2152 = sor.u32 256, 64
  %2153 = vbcast.lane.b32.xlu0 %v2119, %s2152
  %v2154 = vpop.permute.xlu0 %2153
  %s2156 = sor.u32 256, 72
  %2157 = vbcast.lane.b32.xlu0 %v2119, %s2156
  %v2158 = vpop.permute.xlu0 %2157
  %s2160 = sor.u32 256, 80
  %2161 = vbcast.lane.b32.xlu0 %v2119, %s2160
  %v2162 = vpop.permute.xlu0 %2161
  %s2164 = sor.u32 256, 88
  %2165 = vbcast.lane.b32.xlu0 %v2119, %s2164
  %v2166 = vpop.permute.xlu0 %2165
  %s2168 = sor.u32 256, 96
  %2169 = vbcast.lane.b32.xlu0 %v2119, %s2168
  %v2170 = vpop.permute.xlu0 %2169
  %s2172 = sor.u32 256, 104
  %2173 = vbcast.lane.b32.xlu0 %v2119, %s2172
  %v2174 = vpop.permute.xlu0 %2173
  %s2176 = sor.u32 256, 112
  %2177 = vbcast.lane.b32.xlu0 %v2119, %s2176
  %v2178 = vpop.permute.xlu0 %2177
  %s2180 = sor.u32 256, 120
  %2181 = vbcast.lane.b32.xlu0 %v2119, %s2180
  %v2182 = vpop.permute.xlu0 %2181
  %v2183 = vlaneseq
  %v2184 = vshrl.u32 %v2183, 7
  %v2185 = vsub.s32 1, %v2184
  %v2186 = vrot.slane %v1843, %v2185
  %2188 = vbcast.lane.b32.xlu0 %v2186, 256
  %v2189 = vpop.permute.xlu0 %2188
  %s2191 = sor.u32 256, 8
  %2192 = vbcast.lane.b32.xlu0 %v2186, %s2191
  %v2193 = vpop.permute.xlu0 %2192
  %s2195 = sor.u32 256, 16
  %2196 = vbcast.lane.b32.xlu0 %v2186, %s2195
  %v2197 = vpop.permute.xlu0 %2196
  %s2199 = sor.u32 256, 24
  %2200 = vbcast.lane.b32.xlu0 %v2186, %s2199
  %v2201 = vpop.permute.xlu0 %2200
  %s2203 = sor.u32 256, 32
  %2204 = vbcast.lane.b32.xlu0 %v2186, %s2203
  %v2205 = vpop.permute.xlu0 %2204
  %s2207 = sor.u32 256, 40
  %2208 = vbcast.lane.b32.xlu0 %v2186, %s2207
  %v2209 = vpop.permute.xlu0 %2208
  %s2211 = sor.u32 256, 48
  %2212 = vbcast.lane.b32.xlu0 %v2186, %s2211
  %v2213 = vpop.permute.xlu0 %2212
  %s2215 = sor.u32 256, 56
  %2216 = vbcast.lane.b32.xlu0 %v2186, %s2215
  %v2217 = vpop.permute.xlu0 %2216
  %s2219 = sor.u32 256, 64
  %2220 = vbcast.lane.b32.xlu0 %v2186, %s2219
  %v2221 = vpop.permute.xlu0 %2220
  %s2223 = sor.u32 256, 72
  %2224 = vbcast.lane.b32.xlu0 %v2186, %s2223
  %v2225 = vpop.permute.xlu0 %2224
  %s2227 = sor.u32 256, 80
  %2228 = vbcast.lane.b32.xlu0 %v2186, %s2227
  %v2229 = vpop.permute.xlu0 %2228
  %s2231 = sor.u32 256, 88
  %2232 = vbcast.lane.b32.xlu0 %v2186, %s2231
  %v2233 = vpop.permute.xlu0 %2232
  %s2235 = sor.u32 256, 96
  %2236 = vbcast.lane.b32.xlu0 %v2186, %s2235
  %v2237 = vpop.permute.xlu0 %2236
  %s2239 = sor.u32 256, 104
  %2240 = vbcast.lane.b32.xlu0 %v2186, %s2239
  %v2241 = vpop.permute.xlu0 %2240
  %s2243 = sor.u32 256, 112
  %2244 = vbcast.lane.b32.xlu0 %v2186, %s2243
  %v2245 = vpop.permute.xlu0 %2244
  %s2247 = sor.u32 256, 120
  %2248 = vbcast.lane.b32.xlu0 %v2186, %s2247
  %v2249 = vpop.permute.xlu0 %2248
  %v2250 = vlaneseq
  %v2251 = vshrl.u32 %v2250, 7
  %v2252 = vsub.s32 1, %v2251
  %v2253 = vrot.slane %v1845, %v2252
  %2255 = vbcast.lane.b32.xlu0 %v2253, 256
  %v2256 = vpop.permute.xlu0 %2255
  %s2258 = sor.u32 256, 8
  %2259 = vbcast.lane.b32.xlu0 %v2253, %s2258
  %v2260 = vpop.permute.xlu0 %2259
  %s2262 = sor.u32 256, 16
  %2263 = vbcast.lane.b32.xlu0 %v2253, %s2262
  %v2264 = vpop.permute.xlu0 %2263
  %s2266 = sor.u32 256, 24
  %2267 = vbcast.lane.b32.xlu0 %v2253, %s2266
  %v2268 = vpop.permute.xlu0 %2267
  %s2270 = sor.u32 256, 32
  %2271 = vbcast.lane.b32.xlu0 %v2253, %s2270
  %v2272 = vpop.permute.xlu0 %2271
  %s2274 = sor.u32 256, 40
  %2275 = vbcast.lane.b32.xlu0 %v2253, %s2274
  %v2276 = vpop.permute.xlu0 %2275
  %s2278 = sor.u32 256, 48
  %2279 = vbcast.lane.b32.xlu0 %v2253, %s2278
  %v2280 = vpop.permute.xlu0 %2279
  %s2282 = sor.u32 256, 56
  %2283 = vbcast.lane.b32.xlu0 %v2253, %s2282
  %v2284 = vpop.permute.xlu0 %2283
  %s2286 = sor.u32 256, 64
  %2287 = vbcast.lane.b32.xlu0 %v2253, %s2286
  %v2288 = vpop.permute.xlu0 %2287
  %s2290 = sor.u32 256, 72
  %2291 = vbcast.lane.b32.xlu0 %v2253, %s2290
  %v2292 = vpop.permute.xlu0 %2291
  %s2294 = sor.u32 256, 80
  %2295 = vbcast.lane.b32.xlu0 %v2253, %s2294
  %v2296 = vpop.permute.xlu0 %2295
  %s2298 = sor.u32 256, 88
  %2299 = vbcast.lane.b32.xlu0 %v2253, %s2298
  %v2300 = vpop.permute.xlu0 %2299
  %s2302 = sor.u32 256, 96
  %2303 = vbcast.lane.b32.xlu0 %v2253, %s2302
  %v2304 = vpop.permute.xlu0 %2303
  %s2306 = sor.u32 256, 104
  %2307 = vbcast.lane.b32.xlu0 %v2253, %s2306
  %v2308 = vpop.permute.xlu0 %2307
  %s2310 = sor.u32 256, 112
  %2311 = vbcast.lane.b32.xlu0 %v2253, %s2310
  %v2312 = vpop.permute.xlu0 %2311
  %s2314 = sor.u32 256, 120
  %2315 = vbcast.lane.b32.xlu0 %v2253, %s2314
  %v2316 = vpop.permute.xlu0 %2315
  %v2317 = vlaneseq
  %v2318 = vshrl.u32 %v2317, 7
  %v2319 = vsub.s32 1, %v2318
  %v2320 = vrot.slane %v1847, %v2319
  %2322 = vbcast.lane.b32.xlu0 %v2320, 256
  %v2323 = vpop.permute.xlu0 %2322
  %s2325 = sor.u32 256, 8
  %2326 = vbcast.lane.b32.xlu0 %v2320, %s2325
  %v2327 = vpop.permute.xlu0 %2326
  %s2329 = sor.u32 256, 16
  %2330 = vbcast.lane.b32.xlu0 %v2320, %s2329
  %v2331 = vpop.permute.xlu0 %2330
  %s2333 = sor.u32 256, 24
  %2334 = vbcast.lane.b32.xlu0 %v2320, %s2333
  %v2335 = vpop.permute.xlu0 %2334
  %s2337 = sor.u32 256, 32
  %2338 = vbcast.lane.b32.xlu0 %v2320, %s2337
  %v2339 = vpop.permute.xlu0 %2338
  %s2341 = sor.u32 256, 40
  %2342 = vbcast.lane.b32.xlu0 %v2320, %s2341
  %v2343 = vpop.permute.xlu0 %2342
  %s2345 = sor.u32 256, 48
  %2346 = vbcast.lane.b32.xlu0 %v2320, %s2345
  %v2347 = vpop.permute.xlu0 %2346
  %s2349 = sor.u32 256, 56
  %2350 = vbcast.lane.b32.xlu0 %v2320, %s2349
  %v2351 = vpop.permute.xlu0 %2350
  %s2353 = sor.u32 256, 64
  %2354 = vbcast.lane.b32.xlu0 %v2320, %s2353
  %v2355 = vpop.permute.xlu0 %2354
  %s2357 = sor.u32 256, 72
  %2358 = vbcast.lane.b32.xlu0 %v2320, %s2357
  %v2359 = vpop.permute.xlu0 %2358
  %s2361 = sor.u32 256, 80
  %2362 = vbcast.lane.b32.xlu0 %v2320, %s2361
  %v2363 = vpop.permute.xlu0 %2362
  %s2365 = sor.u32 256, 88
  %2366 = vbcast.lane.b32.xlu0 %v2320, %s2365
  %v2367 = vpop.permute.xlu0 %2366
  %s2369 = sor.u32 256, 96
  %2370 = vbcast.lane.b32.xlu0 %v2320, %s2369
  %v2371 = vpop.permute.xlu0 %2370
  %s2373 = sor.u32 256, 104
  %2374 = vbcast.lane.b32.xlu0 %v2320, %s2373
  %v2375 = vpop.permute.xlu0 %2374
  %s2377 = sor.u32 256, 112
  %2378 = vbcast.lane.b32.xlu0 %v2320, %s2377
  %v2379 = vpop.permute.xlu0 %2378
  %s2381 = sor.u32 256, 120
  %2382 = vbcast.lane.b32.xlu0 %v2320, %s2381
  %v2383 = vpop.permute.xlu0 %2382
  %v2384 = vmul.f32 %v14, %v1854
  %v2385 = vmul.f32 %v15, %v1858
  %v2386 = vmul.f32 %v16, %v1862
  %v2387 = vmul.f32 %v17, %v1866
  %v2388 = vmul.f32 %v18, %v1870
  %v2389 = vmul.f32 %v19, %v1874
  %v2390 = vmul.f32 %v20, %v1878
  %v2391 = vmul.f32 %v21, %v1882
  %v2392 = vmul.f32 %v22, %v1886
  %v2393 = vmul.f32 %v23, %v1890
  %v2394 = vmul.f32 %v24, %v1894
  %v2395 = vmul.f32 %v25, %v1898
  %v2396 = vmul.f32 %v26, %v1902
  %v2397 = vmul.f32 %v27, %v1906
  %v2398 = vmul.f32 %v28, %v1910
  %v2399 = vmul.f32 %v29, %v1914
  %v2400 = vmul.f32 %v30, %v1921
  %v2401 = vmul.f32 %v31, %v1925
  %v2402 = vmul.f32 %v32, %v1929
  %v2403 = vmul.f32 %v33, %v1933
  %v2404 = vmul.f32 %v34, %v1937
  %v2405 = vmul.f32 %v35, %v1941
  %v2406 = vmul.f32 %v36, %v1945
  %v2407 = vmul.f32 %v37, %v1949
  %v2408 = vmul.f32 %v38, %v1953
  %v2409 = vmul.f32 %v39, %v1957
  %v2410 = vmul.f32 %v40, %v1961
  %v2411 = vmul.f32 %v41, %v1965
  %v2412 = vmul.f32 %v42, %v1969
  %v2413 = vmul.f32 %v43, %v1973
  %v2414 = vmul.f32 %v44, %v1977
  %v2415 = vmul.f32 %v45, %v1981
  %v2416 = vmul.f32 %v46, %v1988
  %v2417 = vmul.f32 %v47, %v1992
  %v2418 = vmul.f32 %v48, %v1996
  %v2419 = vmul.f32 %v49, %v2000
  %v2420 = vmul.f32 %v50, %v2004
  %v2421 = vmul.f32 %v51, %v2008
  %v2422 = vmul.f32 %v52, %v2012
  %v2423 = vmul.f32 %v53, %v2016
  %v2424 = vmul.f32 %v54, %v2020
  %v2425 = vmul.f32 %v55, %v2024
  %v2426 = vmul.f32 %v56, %v2028
  %v2427 = vmul.f32 %v57, %v2032
  %v2428 = vmul.f32 %v58, %v2036
  %v2429 = vmul.f32 %v59, %v2040
  %v2430 = vmul.f32 %v60, %v2044
  %v2431 = vmul.f32 %v61, %v2048
  %v2432 = vmul.f32 %v62, %v2055
  %v2433 = vmul.f32 %v63, %v2059
  %v2434 = vmul.f32 %v64, %v2063
  %v2435 = vmul.f32 %v65, %v2067
  %v2436 = vmul.f32 %v66, %v2071
  %v2437 = vmul.f32 %v67, %v2075
  %v2438 = vmul.f32 %v68, %v2079
  %v2439 = vmul.f32 %v69, %v2083
  %v2440 = vmul.f32 %v70, %v2087
  %v2441 = vmul.f32 %v71, %v2091
  %v2442 = vmul.f32 %v72, %v2095
  %v2443 = vmul.f32 %v73, %v2099
  %v2444 = vmul.f32 %v74, %v2103
  %v2445 = vmul.f32 %v75, %v2107
  %v2446 = vmul.f32 %v76, %v2111
  %v2447 = vmul.f32 %v77, %v2115
  %v2448 = vmul.f32 %v78, %v2122
  %v2449 = vmul.f32 %v79, %v2126
  %v2450 = vmul.f32 %v80, %v2130
  %v2451 = vmul.f32 %v81, %v2134
  %v2452 = vmul.f32 %v82, %v2138
  %v2453 = vmul.f32 %v83, %v2142
  %v2454 = vmul.f32 %v84, %v2146
  %v2455 = vmul.f32 %v85, %v2150
  %v2456 = vmul.f32 %v86, %v2154
  %v2457 = vmul.f32 %v87, %v2158
  %v2458 = vmul.f32 %v88, %v2162
  %v2459 = vmul.f32 %v89, %v2166
  %v2460 = vmul.f32 %v90, %v2170
  %v2461 = vmul.f32 %v91, %v2174
  %v2462 = vmul.f32 %v92, %v2178
  %v2463 = vmul.f32 %v93, %v2182
  %v2464 = vmul.f32 %v94, %v2189
  %v2465 = vmul.f32 %v95, %v2193
  %v2466 = vmul.f32 %v96, %v2197
  %v2467 = vmul.f32 %v97, %v2201
  %v2468 = vmul.f32 %v98, %v2205
  %v2469 = vmul.f32 %v99, %v2209
  %v2470 = vmul.f32 %v100, %v2213
  %v2471 = vmul.f32 %v101, %v2217
  %v2472 = vmul.f32 %v102, %v2221
  %v2473 = vmul.f32 %v103, %v2225
  %v2474 = vmul.f32 %v104, %v2229
  %v2475 = vmul.f32 %v105, %v2233
  %v2476 = vmul.f32 %v106, %v2237
  %v2477 = vmul.f32 %v107, %v2241
  %v2478 = vmul.f32 %v108, %v2245
  %v2479 = vmul.f32 %v109, %v2249
  %v2480 = vmul.f32 %v110, %v2256
  %v2481 = vmul.f32 %v111, %v2260
  %v2482 = vmul.f32 %v112, %v2264
  %v2483 = vmul.f32 %v113, %v2268
  %v2484 = vmul.f32 %v114, %v2272
  %v2485 = vmul.f32 %v115, %v2276
  %v2486 = vmul.f32 %v116, %v2280
  %v2487 = vmul.f32 %v117, %v2284
  %v2488 = vmul.f32 %v118, %v2288
  %v2489 = vmul.f32 %v119, %v2292
  %v2490 = vmul.f32 %v120, %v2296
  %v2491 = vmul.f32 %v121, %v2300
  %v2492 = vmul.f32 %v122, %v2304
  %v2493 = vmul.f32 %v123, %v2308
  %v2494 = vmul.f32 %v124, %v2312
  %v2495 = vmul.f32 %v125, %v2316
  %v2496 = vmul.f32 %v126, %v2323
  %v2497 = vmul.f32 %v127, %v2327
  %v2498 = vmul.f32 %v128, %v2331
  %v2499 = vmul.f32 %v129, %v2335
  %v2500 = vmul.f32 %v130, %v2339
  %v2501 = vmul.f32 %v131, %v2343
  %v2502 = vmul.f32 %v132, %v2347
  %v2503 = vmul.f32 %v133, %v2351
  %v2504 = vmul.f32 %v134, %v2355
  %v2505 = vmul.f32 %v135, %v2359
  %v2506 = vmul.f32 %v136, %v2363
  %v2507 = vmul.f32 %v137, %v2367
  %v2508 = vmul.f32 %v138, %v2371
  %v2509 = vmul.f32 %v139, %v2375
  %v2510 = vmul.f32 %v140, %v2379
  %v2511 = vmul.f32 %v141, %v2383
  %2512 = vst.msk [vmem:[%s3] sm:$0xff] %vm142, %v2384
  %2513 = vst.msk [vmem:[%s3 + $0x8] sm:$0xff] %vm142, %v2385
  %2514 = vst.msk [vmem:[%s3 + $0x10] sm:$0xff] %vm142, %v2386
  %2515 = vst.msk [vmem:[%s3 + $0x18] sm:$0xff] %vm142, %v2387
  %2516 = vst.msk [vmem:[%s3 + $0x20] sm:$0xff] %vm142, %v2388
  %2517 = vst.msk [vmem:[%s3 + $0x28] sm:$0xff] %vm142, %v2389
  %2518 = vst.msk [vmem:[%s3 + $0x30] sm:$0xff] %vm142, %v2390
  %2519 = vst.msk [vmem:[%s3 + $0x38] sm:$0xff] %vm142, %v2391
  %2520 = vst.msk [vmem:[%s3 + $0x40] sm:$0xff] %vm142, %v2392
  %2521 = vst.msk [vmem:[%s3 + $0x48] sm:$0xff] %vm142, %v2393
  %2522 = vst.msk [vmem:[%s3 + $0x50] sm:$0xff] %vm142, %v2394
  %2523 = vst.msk [vmem:[%s3 + $0x58] sm:$0xff] %vm142, %v2395
  %2524 = vst.msk [vmem:[%s3 + $0x60] sm:$0xff] %vm142, %v2396
  %2525 = vst.msk [vmem:[%s3 + $0x68] sm:$0xff] %vm142, %v2397
  %2526 = vst.msk [vmem:[%s3 + $0x70] sm:$0xff] %vm142, %v2398
  %2527 = vst.msk [vmem:[%s3 + $0x78] sm:$0xff] %vm142, %v2399
  %2528 = vst.msk [vmem:[%s3 + $0x80] sm:$0xff] %vm142, %v2400
  %2529 = vst.msk [vmem:[%s3 + $0x88] sm:$0xff] %vm142, %v2401
  %2530 = vst.msk [vmem:[%s3 + $0x90] sm:$0xff] %vm142, %v2402
  %2531 = vst.msk [vmem:[%s3 + $0x98] sm:$0xff] %vm142, %v2403
  %2532 = vst.msk [vmem:[%s3 + $0xa0] sm:$0xff] %vm142, %v2404
  %2533 = vst.msk [vmem:[%s3 + $0xa8] sm:$0xff] %vm142, %v2405
  %2534 = vst.msk [vmem:[%s3 + $0xb0] sm:$0xff] %vm142, %v2406
  %2535 = vst.msk [vmem:[%s3 + $0xb8] sm:$0xff] %vm142, %v2407
  %2536 = vst.msk [vmem:[%s3 + $0xc0] sm:$0xff] %vm142, %v2408
  %2537 = vst.msk [vmem:[%s3 + $0xc8] sm:$0xff] %vm142, %v2409
  %2538 = vst.msk [vmem:[%s3 + $0xd0] sm:$0xff] %vm142, %v2410
  %2539 = vst.msk [vmem:[%s3 + $0xd8] sm:$0xff] %vm142, %v2411
  %2540 = vst.msk [vmem:[%s3 + $0xe0] sm:$0xff] %vm142, %v2412
  %2541 = vst.msk [vmem:[%s3 + $0xe8] sm:$0xff] %vm142, %v2413
  %2542 = vst.msk [vmem:[%s3 + $0xf0] sm:$0xff] %vm142, %v2414
  %2543 = vst.msk [vmem:[%s3 + $0xf8] sm:$0xff] %vm142, %v2415
  %2544 = vst.msk [vmem:[%s3 + $0x100] sm:$0xff] %vm142, %v2416
  %2545 = vst.msk [vmem:[%s3 + $0x108] sm:$0xff] %vm142, %v2417
  %2546 = vst.msk [vmem:[%s3 + $0x110] sm:$0xff] %vm142, %v2418
  %2547 = vst.msk [vmem:[%s3 + $0x118] sm:$0xff] %vm142, %v2419
  %2548 = vst.msk [vmem:[%s3 + $0x120] sm:$0xff] %vm142, %v2420
  %2549 = vst.msk [vmem:[%s3 + $0x128] sm:$0xff] %vm142, %v2421
  %2550 = vst.msk [vmem:[%s3 + $0x130] sm:$0xff] %vm142, %v2422
  %2551 = vst.msk [vmem:[%s3 + $0x138] sm:$0xff] %vm142, %v2423
  %2552 = vst.msk [vmem:[%s3 + $0x140] sm:$0xff] %vm142, %v2424
  %2553 = vst.msk [vmem:[%s3 + $0x148] sm:$0xff] %vm142, %v2425
  %2554 = vst.msk [vmem:[%s3 + $0x150] sm:$0xff] %vm142, %v2426
  %2555 = vst.msk [vmem:[%s3 + $0x158] sm:$0xff] %vm142, %v2427
  %2556 = vst.msk [vmem:[%s3 + $0x160] sm:$0xff] %vm142, %v2428
  %2557 = vst.msk [vmem:[%s3 + $0x168] sm:$0xff] %vm142, %v2429
  %2558 = vst.msk [vmem:[%s3 + $0x170] sm:$0xff] %vm142, %v2430
  %2559 = vst.msk [vmem:[%s3 + $0x178] sm:$0xff] %vm142, %v2431
  %2560 = vst.msk [vmem:[%s3 + $0x180] sm:$0xff] %vm142, %v2432
  %2561 = vst.msk [vmem:[%s3 + $0x188] sm:$0xff] %vm142, %v2433
  %2562 = vst.msk [vmem:[%s3 + $0x190] sm:$0xff] %vm142, %v2434
  %2563 = vst.msk [vmem:[%s3 + $0x198] sm:$0xff] %vm142, %v2435
  %2564 = vst.msk [vmem:[%s3 + $0x1a0] sm:$0xff] %vm142, %v2436
  %2565 = vst.msk [vmem:[%s3 + $0x1a8] sm:$0xff] %vm142, %v2437
  %2566 = vst.msk [vmem:[%s3 + $0x1b0] sm:$0xff] %vm142, %v2438
  %2567 = vst.msk [vmem:[%s3 + $0x1b8] sm:$0xff] %vm142, %v2439
  %2568 = vst.msk [vmem:[%s3 + $0x1c0] sm:$0xff] %vm142, %v2440
  %2569 = vst.msk [vmem:[%s3 + $0x1c8] sm:$0xff] %vm142, %v2441
  %2570 = vst.msk [vmem:[%s3 + $0x1d0] sm:$0xff] %vm142, %v2442
  %2571 = vst.msk [vmem:[%s3 + $0x1d8] sm:$0xff] %vm142, %v2443
  %2572 = vst.msk [vmem:[%s3 + $0x1e0] sm:$0xff] %vm142, %v2444
  %2573 = vst.msk [vmem:[%s3 + $0x1e8] sm:$0xff] %vm142, %v2445
  %2574 = vst.msk [vmem:[%s3 + $0x1f0] sm:$0xff] %vm142, %v2446
  %2575 = vst.msk [vmem:[%s3 + $0x1f8] sm:$0xff] %vm142, %v2447
  %2576 = vst.msk [vmem:[%s3 + $0x200] sm:$0xff] %vm142, %v2448
  %2577 = vst.msk [vmem:[%s3 + $0x208] sm:$0xff] %vm142, %v2449
  %2578 = vst.msk [vmem:[%s3 + $0x210] sm:$0xff] %vm142, %v2450
  %2579 = vst.msk [vmem:[%s3 + $0x218] sm:$0xff] %vm142, %v2451
  %2580 = vst.msk [vmem:[%s3 + $0x220] sm:$0xff] %vm142, %v2452
  %2581 = vst.msk [vmem:[%s3 + $0x228] sm:$0xff] %vm142, %v2453
  %2582 = vst.msk [vmem:[%s3 + $0x230] sm:$0xff] %vm142, %v2454
  %2583 = vst.msk [vmem:[%s3 + $0x238] sm:$0xff] %vm142, %v2455
  %2584 = vst.msk [vmem:[%s3 + $0x240] sm:$0xff] %vm142, %v2456
  %2585 = vst.msk [vmem:[%s3 + $0x248] sm:$0xff] %vm142, %v2457
  %2586 = vst.msk [vmem:[%s3 + $0x250] sm:$0xff] %vm142, %v2458
  %2587 = vst.msk [vmem:[%s3 + $0x258] sm:$0xff] %vm142, %v2459
  %2588 = vst.msk [vmem:[%s3 + $0x260] sm:$0xff] %vm142, %v2460
  %2589 = vst.msk [vmem:[%s3 + $0x268] sm:$0xff] %vm142, %v2461
  %2590 = vst.msk [vmem:[%s3 + $0x270] sm:$0xff] %vm142, %v2462
  %2591 = vst.msk [vmem:[%s3 + $0x278] sm:$0xff] %vm142, %v2463
  %2592 = vst.msk [vmem:[%s3 + $0x280] sm:$0xff] %vm142, %v2464
  %2593 = vst.msk [vmem:[%s3 + $0x288] sm:$0xff] %vm142, %v2465
  %2594 = vst.msk [vmem:[%s3 + $0x290] sm:$0xff] %vm142, %v2466
  %2595 = vst.msk [vmem:[%s3 + $0x298] sm:$0xff] %vm142, %v2467
  %2596 = vst.msk [vmem:[%s3 + $0x2a0] sm:$0xff] %vm142, %v2468
  %2597 = vst.msk [vmem:[%s3 + $0x2a8] sm:$0xff] %vm142, %v2469
  %2598 = vst.msk [vmem:[%s3 + $0x2b0] sm:$0xff] %vm142, %v2470
  %2599 = vst.msk [vmem:[%s3 + $0x2b8] sm:$0xff] %vm142, %v2471
  %2600 = vst.msk [vmem:[%s3 + $0x2c0] sm:$0xff] %vm142, %v2472
  %2601 = vst.msk [vmem:[%s3 + $0x2c8] sm:$0xff] %vm142, %v2473
  %2602 = vst.msk [vmem:[%s3 + $0x2d0] sm:$0xff] %vm142, %v2474
  %2603 = vst.msk [vmem:[%s3 + $0x2d8] sm:$0xff] %vm142, %v2475
  %2604 = vst.msk [vmem:[%s3 + $0x2e0] sm:$0xff] %vm142, %v2476
  %2605 = vst.msk [vmem:[%s3 + $0x2e8] sm:$0xff] %vm142, %v2477
  %2606 = vst.msk [vmem:[%s3 + $0x2f0] sm:$0xff] %vm142, %v2478
  %2607 = vst.msk [vmem:[%s3 + $0x2f8] sm:$0xff] %vm142, %v2479
  %2608 = vst.msk [vmem:[%s3 + $0x300] sm:$0xff] %vm142, %v2480
  %2609 = vst.msk [vmem:[%s3 + $0x308] sm:$0xff] %vm142, %v2481
  %2610 = vst.msk [vmem:[%s3 + $0x310] sm:$0xff] %vm142, %v2482
  %2611 = vst.msk [vmem:[%s3 + $0x318] sm:$0xff] %vm142, %v2483
  %2612 = vst.msk [vmem:[%s3 + $0x320] sm:$0xff] %vm142, %v2484
  %2613 = vst.msk [vmem:[%s3 + $0x328] sm:$0xff] %vm142, %v2485
  %2614 = vst.msk [vmem:[%s3 + $0x330] sm:$0xff] %vm142, %v2486
  %2615 = vst.msk [vmem:[%s3 + $0x338] sm:$0xff] %vm142, %v2487
  %2616 = vst.msk [vmem:[%s3 + $0x340] sm:$0xff] %vm142, %v2488
  %2617 = vst.msk [vmem:[%s3 + $0x348] sm:$0xff] %vm142, %v2489
  %2618 = vst.msk [vmem:[%s3 + $0x350] sm:$0xff] %vm142, %v2490
  %2619 = vst.msk [vmem:[%s3 + $0x358] sm:$0xff] %vm142, %v2491
  %2620 = vst.msk [vmem:[%s3 + $0x360] sm:$0xff] %vm142, %v2492
  %2621 = vst.msk [vmem:[%s3 + $0x368] sm:$0xff] %vm142, %v2493
  %2622 = vst.msk [vmem:[%s3 + $0x370] sm:$0xff] %vm142, %v2494
  %2623 = vst.msk [vmem:[%s3 + $0x378] sm:$0xff] %vm142, %v2495
  %2624 = vst.msk [vmem:[%s3 + $0x380] sm:$0xff] %vm142, %v2496
  %2625 = vst.msk [vmem:[%s3 + $0x388] sm:$0xff] %vm142, %v2497
  %2626 = vst.msk [vmem:[%s3 + $0x390] sm:$0xff] %vm142, %v2498
  %2627 = vst.msk [vmem:[%s3 + $0x398] sm:$0xff] %vm142, %v2499
  %2628 = vst.msk [vmem:[%s3 + $0x3a0] sm:$0xff] %vm142, %v2500
  %2629 = vst.msk [vmem:[%s3 + $0x3a8] sm:$0xff] %vm142, %v2501
  %2630 = vst.msk [vmem:[%s3 + $0x3b0] sm:$0xff] %vm142, %v2502
  %2631 = vst.msk [vmem:[%s3 + $0x3b8] sm:$0xff] %vm142, %v2503
  %2632 = vst.msk [vmem:[%s3 + $0x3c0] sm:$0xff] %vm142, %v2504
  %2633 = vst.msk [vmem:[%s3 + $0x3c8] sm:$0xff] %vm142, %v2505
  %2634 = vst.msk [vmem:[%s3 + $0x3d0] sm:$0xff] %vm142, %v2506
  %2635 = vst.msk [vmem:[%s3 + $0x3d8] sm:$0xff] %vm142, %v2507
  %2636 = vst.msk [vmem:[%s3 + $0x3e0] sm:$0xff] %vm142, %v2508
  %2637 = vst.msk [vmem:[%s3 + $0x3e8] sm:$0xff] %vm142, %v2509
  %2638 = vst.msk [vmem:[%s3 + $0x3f0] sm:$0xff] %vm142, %v2510
  %2639 = vst.msk [vmem:[%s3 + $0x3f8] sm:$0xff] %vm142, %v2511
  // Predicated region
  $region14: #{se_attention_forward.1} parent=0 // pred_check
    _
  $region15: #{se_attention_forward.1} parent=0 // pred_check_branch
    %2641 = sbr.rel (0) target = $region17
  $region16: #{se_attention_forward.1} parent=0 // pred_region
    _
  $region17: #{se_attention_forward.1} parent=0 // pred_fallthru
    _
  // Predicated region
  $region18: #{se_attention_forward.1} parent=0 // pred_check
    _
  $region19: #{se_attention_forward.1} parent=0 // pred_check_branch
    %2643 = sbr.rel (0) target = $region21
  $region20: #{se_attention_forward.1} parent=0 // pred_region
    _
  $region21: #{se_attention_forward.1} parent=0 // pred_fallthru
    _

</llo_original>
